<compile_context>
chip_gen: v7x
topology: tpu7x:2x2x1
jax: 0.10.0
libtpu: 0.0.40
codegen_flags: <defaults>
</compile_context>

<pallas_src>
import jax
import jax.numpy as jnp
from jax import lax
from jax.experimental import pallas as pl
from jax.experimental.pallas import tpu as pltpu

# ---------------- model config (small, consistent with the module) ----------------
FEATURES_EMBEDDING = ["city_id", "booker_country", "month"]
EMBEDDING_SIZES = {          # key: (num_embeddings_without_pad, embedding_dim)
    "city_id": (64, 32),
    "booker_country": (8, 16),
    "month": (13, 16),
}
HIDDEN = 32                  # == city embedding dim -> linear_to_city not used
N_LAYERS = 2
OUTPUT_SIZE = EMBEDDING_SIZES["city_id"][0]   # tied projection => output = #cities
FEATURES_DIM = sum(EMBEDDING_SIZES[k][1] for k in FEATURES_EMBEDDING)  # 64

LANE = 128
SUBLANE = 8


def _round_up(a, m):
    return ((a + m - 1) // m) * m


# ---------------------------------- kernel ----------------------------------
def bookingnet_kernel(x_ref, mask_ref, wih0_ref, whh0_ref, w1_ref, wd_ref,
                      out_ref, gi0_scr, h2_scr):
    """2-layer GRU recurrence; bf16 MXU operands, f32 accumulation, biases folded into weights."""
    T, BB, FA = x_ref.shape          # FA = features + 1 (constant-one bias feature)
    H = h2_scr.shape[2]
    O = out_ref.shape[2]

    whh0 = whh0_ref[...]             # (H+1, 3H)   bf16, last row = b_hh0
    w1 = w1_ref[...]                 # (2H+1, 4H)  bf16 fused layer-1 weight (see wrapper)
    one_col = jnp.ones((BB, 1), jnp.bfloat16)   # hoisted constant-1 bias column

    # ---- hoisted layer-0 input projection: one (T*BB, F+1) @ (F+1, 3H) bf16 matmul ----
    # b_ih0 is folded in via x's ones feature, so gi0 already carries the input bias.
    x2 = x_ref[...].reshape(T * BB, FA)
    gi0 = jnp.dot(x2, wih0_ref[...], preferred_element_type=jnp.float32)   # (T*BB, 3H) f32
    gi0_scr[...] = gi0.reshape(T, BB, 3 * H)

    def step(t, carry):
        h1, h2 = carry                                        # f32 (BB, H) each
        gi = gi0_scr[t]                                       # (BB, 3H), includes b_ih0

        # ----- layer 0: [h1 | 1] @ [W_hh0.T ; b_hh0]  ->  gh0 + b_hh0 (all gates) -----
        a0 = jnp.concatenate([h1.astype(jnp.bfloat16), one_col], axis=1)   # (BB, H+1)
        gh = jnp.dot(a0, whh0, preferred_element_type=jnp.float32)         # (BB, 3H)
        r0 = jax.nn.sigmoid(gi[:, 0 * H:1 * H] + gh[:, 0 * H:1 * H])
        z0 = jax.nn.sigmoid(gi[:, 1 * H:2 * H] + gh[:, 1 * H:2 * H])
        n0 = jnp.tanh(gi[:, 2 * H:3 * H] + r0 * gh[:, 2 * H:3 * H])
        h1n = (1.0 - z0) * n0 + z0 * h1
        # TODO(synk): inter-layer rnn_dropout (p=0.1) is identity in eval mode; not modeled.

        # ----- layer 1: single 128-wide MXU push of [h1n | h2 | 1] against fused weight -----
        #   cols [0,2H)  -> gi_rz + gh_rz + (b_ih1_rz + b_hh1_rz)   (already summed)
        #   cols [2H,3H) -> gi_n + b_ih1_n
        #   cols [3H,4H) -> gh_n + b_hh1_n
        a1 = jnp.concatenate([h1n.astype(jnp.bfloat16),
                              h2.astype(jnp.bfloat16), one_col], axis=1)   # (BB, 2H+1)
        g1 = jnp.dot(a1, w1, preferred_element_type=jnp.float32)           # (BB, 4H)
        rz = jax.nn.sigmoid(g1[:, :2 * H])
        r1 = rz[:, :H]
        z1 = rz[:, H:]
        n1 = jnp.tanh(g1[:, 2 * H:3 * H] + r1 * g1[:, 3 * H:])
        h2n = (1.0 - z1) * n1 + z1 * h2

        h2_scr[t] = h2n
        return (h1n, h2n)

    h0 = jnp.zeros((BB, H), jnp.float32)
    # Full unroll for short sequences; cap the unroll if T grows (vreg pressure).
    lax.fori_loop(0, T, step, (h0, h0), unroll=True if T <= 8 else 4)

    # ---- pad_packed emulation: zero the 32-lane h2 history (4x cheaper than masking the
    # wide logits), then one hoisted tied-dense matmul (kept f32; off the recurrent critical
    # path and preserves exact zeros for padded rows) and a plain unmasked store. ----
    h2m = (h2_scr[...] * mask_ref[...]).reshape(T * BB, H)
    logits = jnp.dot(h2m, wd_ref[...], preferred_element_type=jnp.float32)  # (T*BB, O)
    out_ref[...] = logits.reshape(T, BB, O)


# ---------------------------------- wrapper ----------------------------------
def bookingnet_forward(params, batch, seq_length, *, time_major_output=False):
    # Glue: embedding lookups + concatenation (feature_concatenation). Gathers stay in XLA.
    feats = [params["emb"][k.replace("next_", "")][batch[k]] for k in FEATURES_EMBEDDING]
    x = jnp.concatenate(feats, axis=2).astype(jnp.float32)    # (B, T, F)
    # TODO(synk): input dropout (p=0.3) is identity in eval mode; not modeled.
    B, T, F = x.shape
    H = HIDDEN
    O = params["dense"].shape[0]

    seq_length = jnp.reshape(seq_length, (-1,))
    mask = (jnp.arange(T)[None, :] < seq_length[:, None]).astype(jnp.float32)  # (B, T)

    # Batch tiling: sublane-pad; whenever B > 8, split into >=2 batch tiles so the "parallel"
    # grid axis can shard across both TensorCores on v7x (no-op on single-TC v5e/v6e).
    B8 = _round_up(B, SUBLANE)
    BB = min(B8, max(SUBLANE, _round_up(B8 // 2, SUBLANE)), 128)
    B_pad = _round_up(B8, BB)
    nb = B_pad // BB

    # Time-major, bf16, with a constant-1 feature appended (folds b_ih0 into the input matmul).
    x_tm = jnp.transpose(x, (1, 0, 2))                        # (T, B, F)
    x_tm = jnp.pad(x_tm, ((0, 0), (0, B_pad - B), (0, 0)))
    x_tm = jnp.concatenate([x_tm, jnp.ones((T, B_pad, 1), jnp.float32)], axis=2)
    x_tm = x_tm.astype(jnp.bfloat16)                          # (T, B_pad, F+1)
    mask_tm = jnp.pad(jnp.transpose(mask, (1, 0)), ((0, 0), (0, B_pad - B)))[:, :, None]

    g0, g1 = params["gru0"], params["gru1"]
    # layer 0: bias rows folded into the (bf16) weights
    wih0a = jnp.concatenate([g0["w_ih"].T, g0["b_ih"][None, :]], axis=0).astype(jnp.bfloat16)  # (F+1,3H)
    whh0a = jnp.concatenate([g0["w_hh"].T, g0["b_hh"][None, :]], axis=0).astype(jnp.bfloat16)  # (H+1,3H)
    # layer 1: dense (2H+1, 4H)=(65,128) fused weight, biases folded:
    #   cols [0,2H):  [W_ih1_rz.T ; W_hh1_rz.T ; b_ih1_rz + b_hh1_rz]   -> rz pre-activations (summed)
    #   cols [2H,3H): [W_ih1_n.T  ; 0          ; b_ih1_n]               -> gi_n
    #   cols [3H,4H): [0          ; W_hh1_n.T  ; b_hh1_n]               -> gh_n
    w1f = jnp.zeros((2 * H + 1, 4 * H), jnp.float32)
    w1f = w1f.at[:H, :2 * H].set(g1["w_ih"][:2 * H].T)
    w1f = w1f.at[H:2 * H, :2 * H].set(g1["w_hh"][:2 * H].T)
    w1f = w1f.at[2 * H, :2 * H].set(g1["b_ih"][:2 * H] + g1["b_hh"][:2 * H])
    w1f = w1f.at[:H, 2 * H:3 * H].set(g1["w_ih"][2 * H:].T)
    w1f = w1f.at[2 * H, 2 * H:3 * H].set(g1["b_ih"][2 * H:])
    w1f = w1f.at[H:2 * H, 3 * H:].set(g1["w_hh"][2 * H:].T)
    w1f = w1f.at[2 * H, 3 * H:].set(g1["b_hh"][2 * H:])
    w1f = w1f.astype(jnp.bfloat16)
    # tied dense, transposed; emitted with exactly O output columns (full last dim -> legal block,
    # half the writeback of a 128-padded output); kept f32 for accuracy.
    wd = params["dense"].T.astype(jnp.float32)                # (H, O)

    weights = (wih0a, whh0a, w1f, wd)

    def _full_spec(a):
        return pl.BlockSpec(a.shape, lambda b, nd=a.ndim: (0,) * nd)

    # VMEM budget (matters once T / city vocab are scaled, esp. on v7x's 64 MiB VMEM).
    blk_bytes = T * BB * ((F + 1) * 2 + 1 * 4 + O * 4)        # x(bf16) + mask(f32) + out(f32) per tile
    scr_bytes = T * BB * 4 * H * 4                            # gi0 + h2 scratches (f32)
    w_bytes = ((F + 1) * 3 * H + (H + 1) * 3 * H + (2 * H + 1) * 4 * H) * 2 + H * O * 4
    vmem_limit = int(min(48 * 1024 * 1024,
                         max(16 * 1024 * 1024, 8 * (2 * blk_bytes + scr_bytes + 2 * w_bytes))))

    grid_spec = pltpu.PrefetchScalarGridSpec(
        num_scalar_prefetch=0,
        grid=(nb,),
        in_specs=[pl.BlockSpec((T, BB, F + 1), lambda b: (0, b, 0)),
                  pl.BlockSpec((T, BB, 1), lambda b: (0, b, 0))]
                 + [_full_spec(w) for w in weights],
        out_specs=pl.BlockSpec((T, BB, O), lambda b: (0, b, 0)),
        scratch_shapes=[pltpu.VMEM((T, BB, 3 * H), jnp.float32),   # hoisted layer-0 gi
                        pltpu.VMEM((T, BB, H), jnp.float32)],      # h2 history
    )

    out_tm = pl.pallas_call(
        bookingnet_kernel,
        out_shape=jax.ShapeDtypeStruct((T, B_pad, O), jnp.float32),
        grid_spec=grid_spec,
        compiler_params=pltpu.CompilerParams(
            dimension_semantics=("parallel",),
            vmem_limit_bytes=vmem_limit),
    )(x_tm, mask_tm, *weights)

    if time_major_output:
        # zero-copy path for time-major consumers (skips a full-tensor transpose pass)
        return out_tm[:, :B, :]
    return jnp.transpose(out_tm, (1, 0, 2))[:B]               # (B, T, O), PyTorch batch-first


# ------------------------------ pure-JAX reference ------------------------------
def _reference_forward(params, batch, seq_length):
    feats = [params["emb"][k.replace("next_", "")][batch[k]] for k in FEATURES_EMBEDDING]
    x = jnp.concatenate(feats, axis=2).astype(jnp.float32)    # (B, T, F)
    B, T, _ = x.shape
    H = HIDDEN

    def cell(x_t, h, w_ih, w_hh, b_ih, b_hh):
        gi = x_t @ w_ih.T + b_ih
        gh = h @ w_hh.T + b_hh
        r = jax.nn.sigmoid(gi[:, :H] + gh[:, :H])
        z = jax.nn.sigmoid(gi[:, H:2 * H] + gh[:, H:2 * H])
        n = jnp.tanh(gi[:, 2 * H:] + r * gh[:, 2 * H:])
        return (1.0 - z) * n + z * h

    h1 = jnp.zeros((B, H), jnp.float32)
    h2 = jnp.zeros((B, H), jnp.float32)
    outs = []
    for t in range(T):
        h1 = cell(x[:, t], h1, params["gru0"]["w_ih"], params["gru0"]["w_hh"],
                  params["gru0"]["b_ih"], params["gru0"]["b_hh"])
        h2 = cell(h1, h2, params["gru1"]["w_ih"], params["gru1"]["w_hh"],
                  params["gru1"]["b_ih"], params["gru1"]["b_hh"])
        outs.append(h2 @ params["dense"].T)
    out = jnp.stack(outs, axis=1)                              # (B, T, O)
    mask = jnp.arange(T)[None, :] < jnp.reshape(seq_length, (-1,))[:, None]
    return jnp.where(mask[:, :, None], out, 0.0)


# ------------------------------ parameter setup ------------------------------
def init_params(key):
    ks = jax.random.split(key, 16)
    params = {"emb": {}}
    # Embeddings: num_embeddings = qty + 1, padding_idx = 0 -> zero row 0.
    for i, (name, (qty, dim)) in enumerate(EMBEDDING_SIZES.items()):
        w = jax.random.normal(ks[i], (qty + 1, dim), jnp.float32)
        w = w.at[0].set(0.0)
        params["emb"][name] = w

    H = HIDDEN
    bound = 1.0 / jnp.sqrt(jnp.float32(H))

    def uni(k, shape):
        return jax.random.uniform(k, shape, jnp.float32, -bound, bound)

    params["gru0"] = {
        "w_ih": uni(ks[4], (3 * H, FEATURES_DIM)),
        "w_hh": uni(ks[5], (3 * H, H)),
        "b_ih": uni(ks[6], (3 * H,)),
        "b_hh": uni(ks[7], (3 * H,)),
    }
    params["gru1"] = {
        "w_ih": uni(ks[8], (3 * H, H)),
        "w_hh": uni(ks[9], (3 * H, H)),
        "b_ih": uni(ks[10], (3 * H,)),
        "b_hh": uni(ks[11], (3 * H,)),
    }
    # tie_embedding_and_projection: dense.weight = city embedding rows 1..qty, shape (O, H)
    params["dense"] = params["emb"]["city_id"][1:]
    return params


# ------------------------------------ main ------------------------------------
if __name__ == "__main__":
    key = jax.random.PRNGKey(0)
    k_par, k_city, k_ctry, k_mon = jax.random.split(key, 4)

    params = init_params(k_par)

    B, T = 4, 8
    seq_length = jnp.array([8, 5, 3, 6], dtype=jnp.int32)
    t_idx = jnp.arange(T)[None, :]
    pad_mask = (t_idx < seq_length[:, None])                  # padded positions -> id 0

    batch = {
        "city_id": jnp.where(
            pad_mask, jax.random.randint(k_city, (B, T), 1, EMBEDDING_SIZES["city_id"][0] + 1), 0
        ).astype(jnp.int32),
        "booker_country": jnp.where(
            pad_mask, jax.random.randint(k_ctry, (B, T), 1, EMBEDDING_SIZES["booker_country"][0] + 1), 0
        ).astype(jnp.int32),
        "month": jnp.where(
            pad_mask, jax.random.randint(k_mon, (B, T), 1, EMBEDDING_SIZES["month"][0] + 1), 0
        ).astype(jnp.int32),
    }

    out = bookingnet_forward(params, batch, seq_length)
    out = jax.block_until_ready(out)

    assert out.shape == (B, T, OUTPUT_SIZE)
    assert bool(jnp.all(jnp.isfinite(out)))
    # outputs past each sequence length must be exactly zero (pad_packed semantics)
    assert bool(jnp.all(jnp.where(pad_mask[:, :, None], True, out == 0.0)))
    # match the pure-JAX f32 reference; tolerance reflects bf16 recurrent matmul operands
    # (f32 accumulation, f32 tied-dense): allow ~5% of the output dynamic range.
    ref = _reference_forward(params, batch, seq_length)
    err = float(jnp.max(jnp.abs(out - ref)))
    scale = float(jnp.max(jnp.abs(ref)))
    assert err <= 5e-2 * scale + 5e-3, (err, scale)

    print("KERNEL_OK")
</pallas_src>

<mosaic_0001>
module attributes {stable_mosaic.version = 11 : i64} {
  func.func @bookingnet_kernel(%arg0: i32, %arg1: memref<8x8x65xbf16, #tpu.memory_space<vmem>>, %arg2: memref<8x8x1xf32, #tpu.memory_space<vmem>>, %arg3: memref<65x96xbf16, #tpu.memory_space<vmem>>, %arg4: memref<33x96xbf16, #tpu.memory_space<vmem>>, %arg5: memref<65x128xbf16, #tpu.memory_space<vmem>>, %arg6: memref<32x64xf32, #tpu.memory_space<vmem>>, %arg7: memref<8x8x64xf32, #tpu.memory_space<vmem>>, %arg8: memref<8x8x96xf32, #tpu.memory_space<vmem>>, %arg9: memref<8x8x32xf32, #tpu.memory_space<vmem>>) attributes {dimension_semantics = [#tpu.dimension_semantics<parallel>], iteration_bounds = array<i64: 1>, scalar_prefetch = 0 : i64, scratch_operands = 2 : i64, tpu.core_type = #tpu.core_type<tc>, window_params = [{transform_indices = @transform_0, window_bounds = array<i64: 8, 8, 65>}, {transform_indices = @transform_1, window_bounds = array<i64: 8, 8, 1>}, {pipeline_mode = #tpu.pipeline_mode<synchronous>, transform_indices = @transform_2, window_bounds = array<i64: 65, 96>}, {pipeline_mode = #tpu.pipeline_mode<synchronous>, transform_indices = @transform_3, window_bounds = array<i64: 33, 96>}, {pipeline_mode = #tpu.pipeline_mode<synchronous>, transform_indices = @transform_4, window_bounds = array<i64: 65, 128>}, {pipeline_mode = #tpu.pipeline_mode<synchronous>, transform_indices = @transform_5, window_bounds = array<i64: 32, 64>}, {transform_indices = @transform_6, window_bounds = array<i64: 8, 8, 64>}]} {
    %c0 = arith.constant 0 : index
    %c0_0 = arith.constant 0 : index
    %0 = vector.load %arg4[%c0, %c0_0] : memref<33x96xbf16, #tpu.memory_space<vmem>>, vector<33x96xbf16>
    %c0_1 = arith.constant 0 : index
    %c0_2 = arith.constant 0 : index
    %1 = vector.load %arg5[%c0_1, %c0_2] : memref<65x128xbf16, #tpu.memory_space<vmem>>, vector<65x128xbf16>
    %cst = arith.constant 1.000000e+00 : bf16
    %2 = vector.broadcast %cst : bf16 to vector<8x1xbf16>
    %c0_3 = arith.constant 0 : index
    %c0_4 = arith.constant 0 : index
    %c0_5 = arith.constant 0 : index
    %3 = vector.load %arg1[%c0_3, %c0_4, %c0_5] : memref<8x8x65xbf16, #tpu.memory_space<vmem>>, vector<8x8x65xbf16>
    %4 = vector.shape_cast %3 : vector<8x8x65xbf16> to vector<64x65xbf16>
    %c0_6 = arith.constant 0 : index
    %c0_7 = arith.constant 0 : index
    %5 = vector.load %arg3[%c0_6, %c0_7] : memref<65x96xbf16, #tpu.memory_space<vmem>>, vector<65x96xbf16>
    %cst_8 = arith.constant dense<0.000000e+00> : vector<64x96xf32>
    %6 = tpu.matmul %4, %5, %cst_8 {dimension_numbers = #tpu.dot_dimension_numbers<[1], [0], [0], [1], [0, 0, 1, 1], [], []>} : vector<64x65xbf16>, vector<65x96xbf16>, vector<64x96xf32> -> vector<64x96xf32>
    %7 = vector.shape_cast %6 : vector<64x96xf32> to vector<8x8x96xf32>
    %c0_9 = arith.constant 0 : index
    %c0_10 = arith.constant 0 : index
    %c0_11 = arith.constant 0 : index
    %8 = vector.load %arg8[%c0_9, %c0_10, %c0_11] : memref<8x8x96xf32, #tpu.memory_space<vmem>>, vector<8x8x96xf32>
    tpu.vector_store %arg8[%c0_9, %c0_10, %c0_11], %7 {strides = array<i32>} : memref<8x8x96xf32, #tpu.memory_space<vmem>>, vector<8x8x96xf32>,
    %cst_12 = arith.constant 0.000000e+00 : f32
    %9 = vector.broadcast %cst_12 : f32 to vector<8x32xf32>
    %c0_i32 = arith.constant 0 : i32
    %10 = arith.index_cast %c0_i32 : i32 to index
    %c0_13 = arith.constant 0 : index
    %c0_14 = arith.constant 0 : index
    %11 = vector.load %arg8[%10, %c0_13, %c0_14] : memref<8x8x96xf32, #tpu.memory_space<vmem>>, vector<1x8x96xf32>
    %12 = vector.shape_cast %11 : vector<1x8x96xf32> to vector<8x96xf32>
    %13 = arith.truncf %9 : vector<8x32xf32> to vector<8x32xbf16>
    %14 = tpu.concatenate %13, %2 in 1 : vector<8x32xbf16>, vector<8x1xbf16> -> vector<8x33xbf16>
    %cst_15 = arith.constant dense<0.000000e+00> : vector<8x96xf32>
    %15 = tpu.matmul %14, %0, %cst_15 {dimension_numbers = #tpu.dot_dimension_numbers<[1], [0], [0], [1], [0, 0, 1, 1], [], []>} : vector<8x33xbf16>, vector<33x96xbf16>, vector<8x96xf32> -> vector<8x96xf32>
    %16 = vector.extract_strided_slice %12 {offsets = [0, 0], sizes = [8, 32], strides = [1, 1]} : vector<8x96xf32> to vector<8x32xf32>
    %17 = vector.extract_strided_slice %15 {offsets = [0, 0], sizes = [8, 32], strides = [1, 1]} : vector<8x96xf32> to vector<8x32xf32>
    %18 = arith.addf %16, %17 : vector<8x32xf32>
    %19 = arith.negf %18 : vector<8x32xf32>
    %20 = math.exp %19 : vector<8x32xf32>
    %cst_16 = arith.constant 1.000000e+00 : f32
    %21 = vector.broadcast %cst_16 : f32 to vector<8x32xf32>
    %22 = arith.addf %21, %20 : vector<8x32xf32>
    %23 = arith.divf %21, %22 : vector<8x32xf32>
    %24 = vector.extract_strided_slice %12 {offsets = [0, 32], sizes = [8, 32], strides = [1, 1]} : vector<8x96xf32> to vector<8x32xf32>
    %25 = vector.extract_strided_slice %15 {offsets = [0, 32], sizes = [8, 32], strides = [1, 1]} : vector<8x96xf32> to vector<8x32xf32>
    %26 = arith.addf %24, %25 : vector<8x32xf32>
    %27 = arith.negf %26 : vector<8x32xf32>
    %28 = math.exp %27 : vector<8x32xf32>
    %cst_17 = arith.constant 1.000000e+00 : f32
    %29 = vector.broadcast %cst_17 : f32 to vector<8x32xf32>
    %30 = arith.addf %29, %28 : vector<8x32xf32>
    %31 = arith.divf %29, %30 : vector<8x32xf32>
    %32 = vector.extract_strided_slice %12 {offsets = [0, 64], sizes = [8, 32], strides = [1, 1]} : vector<8x96xf32> to vector<8x32xf32>
    %33 = vector.extract_strided_slice %15 {offsets = [0, 64], sizes = [8, 32], strides = [1, 1]} : vector<8x96xf32> to vector<8x32xf32>
    %34 = arith.mulf %23, %33 : vector<8x32xf32>
    %35 = arith.addf %32, %34 : vector<8x32xf32>
    %36 = math.tanh %35 : vector<8x32xf32>
    %cst_18 = arith.constant 1.000000e+00 : f32
    %37 = vector.broadcast %cst_18 : f32 to vector<8x32xf32>
    %38 = arith.subf %37, %31 : vector<8x32xf32>
    %39 = arith.mulf %38, %36 : vector<8x32xf32>
    %40 = arith.mulf %31, %9 : vector<8x32xf32>
    %41 = arith.addf %39, %40 : vector<8x32xf32>
    %42 = arith.truncf %41 : vector<8x32xf32> to vector<8x32xbf16>
    %43 = arith.truncf %9 : vector<8x32xf32> to vector<8x32xbf16>
    %44 = tpu.concatenate %42, %43, %2 in 1 : vector<8x32xbf16>, vector<8x32xbf16>, vector<8x1xbf16> -> vector<8x65xbf16>
    %cst_19 = arith.constant dense<0.000000e+00> : vector<8x128xf32>
    %45 = tpu.matmul %44, %1, %cst_19 {dimension_numbers = #tpu.dot_dimension_numbers<[1], [0], [0], [1], [0, 0, 1, 1], [], []>} : vector<8x65xbf16>, vector<65x128xbf16>, vector<8x128xf32> -> vector<8x128xf32>
    %46 = vector.extract_strided_slice %45 {offsets = [0, 0], sizes = [8, 64], strides = [1, 1]} : vector<8x128xf32> to vector<8x64xf32>
    %47 = arith.negf %46 : vector<8x64xf32>
    %48 = math.exp %47 : vector<8x64xf32>
    %cst_20 = arith.constant 1.000000e+00 : f32
    %49 = vector.broadcast %cst_20 : f32 to vector<8x64xf32>
    %50 = arith.addf %49, %48 : vector<8x64xf32>
    %51 = arith.divf %49, %50 : vector<8x64xf32>
    %52 = vector.extract_strided_slice %51 {offsets = [0, 0], sizes = [8, 32], strides = [1, 1]} : vector<8x64xf32> to vector<8x32xf32>
    %53 = vector.extract_strided_slice %51 {offsets = [0, 32], sizes = [8, 32], strides = [1, 1]} : vector<8x64xf32> to vector<8x32xf32>
    %54 = vector.extract_strided_slice %45 {offsets = [0, 64], sizes = [8, 32], strides = [1, 1]} : vector<8x128xf32> to vector<8x32xf32>
    %55 = vector.extract_strided_slice %45 {offsets = [0, 96], sizes = [8, 32], strides = [1, 1]} : vector<8x128xf32> to vector<8x32xf32>
    %56 = arith.mulf %52, %55 : vector<8x32xf32>
    %57 = arith.addf %54, %56 : vector<8x32xf32>
    %58 = math.tanh %57 : vector<8x32xf32>
    %cst_21 = arith.constant 1.000000e+00 : f32
    %59 = vector.broadcast %cst_21 : f32 to vector<8x32xf32>
    %60 = arith.subf %59, %53 : vector<8x32xf32>
    %61 = arith.mulf %60, %58 : vector<8x32xf32>
    %62 = arith.mulf %53, %9 : vector<8x32xf32>
    %63 = arith.addf %61, %62 : vector<8x32xf32>
    %64 = arith.index_cast %c0_i32 : i32 to index
    %c0_22 = arith.constant 0 : index
    %c0_23 = arith.constant 0 : index
    %65 = vector.load %arg9[%64, %c0_22, %c0_23] : memref<8x8x32xf32, #tpu.memory_space<vmem>>, vector<1x8x32xf32>
    %66 = vector.shape_cast %65 : vector<1x8x32xf32> to vector<8x32xf32>
    %67 = vector.shape_cast %63 : vector<8x32xf32> to vector<1x8x32xf32>
    tpu.vector_store %arg9[%64, %c0_22, %c0_23], %67 {strides = array<i32>} : memref<8x8x32xf32, #tpu.memory_space<vmem>>, vector<1x8x32xf32>,
    %c1_i32 = arith.constant 1 : i32
    %68 = arith.index_cast %c1_i32 : i32 to index
    %c0_24 = arith.constant 0 : index
    %c0_25 = arith.constant 0 : index
    %69 = vector.load %arg8[%68, %c0_24, %c0_25] : memref<8x8x96xf32, #tpu.memory_space<vmem>>, vector<1x8x96xf32>
    %70 = vector.shape_cast %69 : vector<1x8x96xf32> to vector<8x96xf32>
    %71 = arith.truncf %41 : vector<8x32xf32> to vector<8x32xbf16>
    %72 = tpu.concatenate %71, %2 in 1 : vector<8x32xbf16>, vector<8x1xbf16> -> vector<8x33xbf16>
    %cst_26 = arith.constant dense<0.000000e+00> : vector<8x96xf32>
    %73 = tpu.matmul %72, %0, %cst_26 {dimension_numbers = #tpu.dot_dimension_numbers<[1], [0], [0], [1], [0, 0, 1, 1], [], []>} : vector<8x33xbf16>, vector<33x96xbf16>, vector<8x96xf32> -> vector<8x96xf32>
    %74 = vector.extract_strided_slice %70 {offsets = [0, 0], sizes = [8, 32], strides = [1, 1]} : vector<8x96xf32> to vector<8x32xf32>
    %75 = vector.extract_strided_slice %73 {offsets = [0, 0], sizes = [8, 32], strides = [1, 1]} : vector<8x96xf32> to vector<8x32xf32>
    %76 = arith.addf %74, %75 : vector<8x32xf32>
    %77 = arith.negf %76 : vector<8x32xf32>
    %78 = math.exp %77 : vector<8x32xf32>
    %cst_27 = arith.constant 1.000000e+00 : f32
    %79 = vector.broadcast %cst_27 : f32 to vector<8x32xf32>
    %80 = arith.addf %79, %78 : vector<8x32xf32>
    %81 = arith.divf %79, %80 : vector<8x32xf32>
    %82 = vector.extract_strided_slice %70 {offsets = [0, 32], sizes = [8, 32], strides = [1, 1]} : vector<8x96xf32> to vector<8x32xf32>
    %83 = vector.extract_strided_slice %73 {offsets = [0, 32], sizes = [8, 32], strides = [1, 1]} : vector<8x96xf32> to vector<8x32xf32>
    %84 = arith.addf %82, %83 : vector<8x32xf32>
    %85 = arith.negf %84 : vector<8x32xf32>
    %86 = math.exp %85 : vector<8x32xf32>
    %cst_28 = arith.constant 1.000000e+00 : f32
    %87 = vector.broadcast %cst_28 : f32 to vector<8x32xf32>
    %88 = arith.addf %87, %86 : vector<8x32xf32>
    %89 = arith.divf %87, %88 : vector<8x32xf32>
    %90 = vector.extract_strided_slice %70 {offsets = [0, 64], sizes = [8, 32], strides = [1, 1]} : vector<8x96xf32> to vector<8x32xf32>
    %91 = vector.extract_strided_slice %73 {offsets = [0, 64], sizes = [8, 32], strides = [1, 1]} : vector<8x96xf32> to vector<8x32xf32>
    %92 = arith.mulf %81, %91 : vector<8x32xf32>
    %93 = arith.addf %90, %92 : vector<8x32xf32>
    %94 = math.tanh %93 : vector<8x32xf32>
    %cst_29 = arith.constant 1.000000e+00 : f32
    %95 = vector.broadcast %cst_29 : f32 to vector<8x32xf32>
    %96 = arith.subf %95, %89 : vector<8x32xf32>
    %97 = arith.mulf %96, %94 : vector<8x32xf32>
    %98 = arith.mulf %89, %41 : vector<8x32xf32>
    %99 = arith.addf %97, %98 : vector<8x32xf32>
    %100 = arith.truncf %99 : vector<8x32xf32> to vector<8x32xbf16>
    %101 = arith.truncf %63 : vector<8x32xf32> to vector<8x32xbf16>
    %102 = tpu.concatenate %100, %101, %2 in 1 : vector<8x32xbf16>, vector<8x32xbf16>, vector<8x1xbf16> -> vector<8x65xbf16>
    %cst_30 = arith.constant dense<0.000000e+00> : vector<8x128xf32>
    %103 = tpu.matmul %102, %1, %cst_30 {dimension_numbers = #tpu.dot_dimension_numbers<[1], [0], [0], [1], [0, 0, 1, 1], [], []>} : vector<8x65xbf16>, vector<65x128xbf16>, vector<8x128xf32> -> vector<8x128xf32>
    %104 = vector.extract_strided_slice %103 {offsets = [0, 0], sizes = [8, 64], strides = [1, 1]} : vector<8x128xf32> to vector<8x64xf32>
    %105 = arith.negf %104 : vector<8x64xf32>
    %106 = math.exp %105 : vector<8x64xf32>
    %cst_31 = arith.constant 1.000000e+00 : f32
    %107 = vector.broadcast %cst_31 : f32 to vector<8x64xf32>
    %108 = arith.addf %107, %106 : vector<8x64xf32>
    %109 = arith.divf %107, %108 : vector<8x64xf32>
    %110 = vector.extract_strided_slice %109 {offsets = [0, 0], sizes = [8, 32], strides = [1, 1]} : vector<8x64xf32> to vector<8x32xf32>
    %111 = vector.extract_strided_slice %109 {offsets = [0, 32], sizes = [8, 32], strides = [1, 1]} : vector<8x64xf32> to vector<8x32xf32>
    %112 = vector.extract_strided_slice %103 {offsets = [0, 64], sizes = [8, 32], strides = [1, 1]} : vector<8x128xf32> to vector<8x32xf32>
    %113 = vector.extract_strided_slice %103 {offsets = [0, 96], sizes = [8, 32], strides = [1, 1]} : vector<8x128xf32> to vector<8x32xf32>
    %114 = arith.mulf %110, %113 : vector<8x32xf32>
    %115 = arith.addf %112, %114 : vector<8x32xf32>
    %116 = math.tanh %115 : vector<8x32xf32>
    %cst_32 = arith.constant 1.000000e+00 : f32
    %117 = vector.broadcast %cst_32 : f32 to vector<8x32xf32>
    %118 = arith.subf %117, %111 : vector<8x32xf32>
    %119 = arith.mulf %118, %116 : vector<8x32xf32>
    %120 = arith.mulf %111, %63 : vector<8x32xf32>
    %121 = arith.addf %119, %120 : vector<8x32xf32>
    %122 = arith.index_cast %c1_i32 : i32 to index
    %c0_33 = arith.constant 0 : index
    %c0_34 = arith.constant 0 : index
    %123 = vector.load %arg9[%122, %c0_33, %c0_34] : memref<8x8x32xf32, #tpu.memory_space<vmem>>, vector<1x8x32xf32>
    %124 = vector.shape_cast %123 : vector<1x8x32xf32> to vector<8x32xf32>
    %125 = vector.shape_cast %121 : vector<8x32xf32> to vector<1x8x32xf32>
    tpu.vector_store %arg9[%122, %c0_33, %c0_34], %125 {strides = array<i32>} : memref<8x8x32xf32, #tpu.memory_space<vmem>>, vector<1x8x32xf32>,
    %c2_i32 = arith.constant 2 : i32
    %126 = arith.index_cast %c2_i32 : i32 to index
    %c0_35 = arith.constant 0 : index
    %c0_36 = arith.constant 0 : index
    %127 = vector.load %arg8[%126, %c0_35, %c0_36] : memref<8x8x96xf32, #tpu.memory_space<vmem>>, vector<1x8x96xf32>
    %128 = vector.shape_cast %127 : vector<1x8x96xf32> to vector<8x96xf32>
    %129 = arith.truncf %99 : vector<8x32xf32> to vector<8x32xbf16>
    %130 = tpu.concatenate %129, %2 in 1 : vector<8x32xbf16>, vector<8x1xbf16> -> vector<8x33xbf16>
    %cst_37 = arith.constant dense<0.000000e+00> : vector<8x96xf32>
    %131 = tpu.matmul %130, %0, %cst_37 {dimension_numbers = #tpu.dot_dimension_numbers<[1], [0], [0], [1], [0, 0, 1, 1], [], []>} : vector<8x33xbf16>, vector<33x96xbf16>, vector<8x96xf32> -> vector<8x96xf32>
    %132 = vector.extract_strided_slice %128 {offsets = [0, 0], sizes = [8, 32], strides = [1, 1]} : vector<8x96xf32> to vector<8x32xf32>
    %133 = vector.extract_strided_slice %131 {offsets = [0, 0], sizes = [8, 32], strides = [1, 1]} : vector<8x96xf32> to vector<8x32xf32>
    %134 = arith.addf %132, %133 : vector<8x32xf32>
    %135 = arith.negf %134 : vector<8x32xf32>
    %136 = math.exp %135 : vector<8x32xf32>
    %cst_38 = arith.constant 1.000000e+00 : f32
    %137 = vector.broadcast %cst_38 : f32 to vector<8x32xf32>
    %138 = arith.addf %137, %136 : vector<8x32xf32>
    %139 = arith.divf %137, %138 : vector<8x32xf32>
    %140 = vector.extract_strided_slice %128 {offsets = [0, 32], sizes = [8, 32], strides = [1, 1]} : vector<8x96xf32> to vector<8x32xf32>
    %141 = vector.extract_strided_slice %131 {offsets = [0, 32], sizes = [8, 32], strides = [1, 1]} : vector<8x96xf32> to vector<8x32xf32>
    %142 = arith.addf %140, %141 : vector<8x32xf32>
    %143 = arith.negf %142 : vector<8x32xf32>
    %144 = math.exp %143 : vector<8x32xf32>
    %cst_39 = arith.constant 1.000000e+00 : f32
    %145 = vector.broadcast %cst_39 : f32 to vector<8x32xf32>
    %146 = arith.addf %145, %144 : vector<8x32xf32>
    %147 = arith.divf %145, %146 : vector<8x32xf32>
    %148 = vector.extract_strided_slice %128 {offsets = [0, 64], sizes = [8, 32], strides = [1, 1]} : vector<8x96xf32> to vector<8x32xf32>
    %149 = vector.extract_strided_slice %131 {offsets = [0, 64], sizes = [8, 32], strides = [1, 1]} : vector<8x96xf32> to vector<8x32xf32>
    %150 = arith.mulf %139, %149 : vector<8x32xf32>
    %151 = arith.addf %148, %150 : vector<8x32xf32>
    %152 = math.tanh %151 : vector<8x32xf32>
    %cst_40 = arith.constant 1.000000e+00 : f32
    %153 = vector.broadcast %cst_40 : f32 to vector<8x32xf32>
    %154 = arith.subf %153, %147 : vector<8x32xf32>
    %155 = arith.mulf %154, %152 : vector<8x32xf32>
    %156 = arith.mulf %147, %99 : vector<8x32xf32>
    %157 = arith.addf %155, %156 : vector<8x32xf32>
    %158 = arith.truncf %157 : vector<8x32xf32> to vector<8x32xbf16>
    %159 = arith.truncf %121 : vector<8x32xf32> to vector<8x32xbf16>
    %160 = tpu.concatenate %158, %159, %2 in 1 : vector<8x32xbf16>, vector<8x32xbf16>, vector<8x1xbf16> -> vector<8x65xbf16>
    %cst_41 = arith.constant dense<0.000000e+00> : vector<8x128xf32>
    %161 = tpu.matmul %160, %1, %cst_41 {dimension_numbers = #tpu.dot_dimension_numbers<[1], [0], [0], [1], [0, 0, 1, 1], [], []>} : vector<8x65xbf16>, vector<65x128xbf16>, vector<8x128xf32> -> vector<8x128xf32>
    %162 = vector.extract_strided_slice %161 {offsets = [0, 0], sizes = [8, 64], strides = [1, 1]} : vector<8x128xf32> to vector<8x64xf32>
    %163 = arith.negf %162 : vector<8x64xf32>
    %164 = math.exp %163 : vector<8x64xf32>
    %cst_42 = arith.constant 1.000000e+00 : f32
    %165 = vector.broadcast %cst_42 : f32 to vector<8x64xf32>
    %166 = arith.addf %165, %164 : vector<8x64xf32>
    %167 = arith.divf %165, %166 : vector<8x64xf32>
    %168 = vector.extract_strided_slice %167 {offsets = [0, 0], sizes = [8, 32], strides = [1, 1]} : vector<8x64xf32> to vector<8x32xf32>
    %169 = vector.extract_strided_slice %167 {offsets = [0, 32], sizes = [8, 32], strides = [1, 1]} : vector<8x64xf32> to vector<8x32xf32>
    %170 = vector.extract_strided_slice %161 {offsets = [0, 64], sizes = [8, 32], strides = [1, 1]} : vector<8x128xf32> to vector<8x32xf32>
    %171 = vector.extract_strided_slice %161 {offsets = [0, 96], sizes = [8, 32], strides = [1, 1]} : vector<8x128xf32> to vector<8x32xf32>
    %172 = arith.mulf %168, %171 : vector<8x32xf32>
    %173 = arith.addf %170, %172 : vector<8x32xf32>
    %174 = math.tanh %173 : vector<8x32xf32>
    %cst_43 = arith.constant 1.000000e+00 : f32
    %175 = vector.broadcast %cst_43 : f32 to vector<8x32xf32>
    %176 = arith.subf %175, %169 : vector<8x32xf32>
    %177 = arith.mulf %176, %174 : vector<8x32xf32>
    %178 = arith.mulf %169, %121 : vector<8x32xf32>
    %179 = arith.addf %177, %178 : vector<8x32xf32>
    %180 = arith.index_cast %c2_i32 : i32 to index
    %c0_44 = arith.constant 0 : index
    %c0_45 = arith.constant 0 : index
    %181 = vector.load %arg9[%180, %c0_44, %c0_45] : memref<8x8x32xf32, #tpu.memory_space<vmem>>, vector<1x8x32xf32>
    %182 = vector.shape_cast %181 : vector<1x8x32xf32> to vector<8x32xf32>
    %183 = vector.shape_cast %179 : vector<8x32xf32> to vector<1x8x32xf32>
    tpu.vector_store %arg9[%180, %c0_44, %c0_45], %183 {strides = array<i32>} : memref<8x8x32xf32, #tpu.memory_space<vmem>>, vector<1x8x32xf32>,
    %c3_i32 = arith.constant 3 : i32
    %184 = arith.index_cast %c3_i32 : i32 to index
    %c0_46 = arith.constant 0 : index
    %c0_47 = arith.constant 0 : index
    %185 = vector.load %arg8[%184, %c0_46, %c0_47] : memref<8x8x96xf32, #tpu.memory_space<vmem>>, vector<1x8x96xf32>
    %186 = vector.shape_cast %185 : vector<1x8x96xf32> to vector<8x96xf32>
    %187 = arith.truncf %157 : vector<8x32xf32> to vector<8x32xbf16>
    %188 = tpu.concatenate %187, %2 in 1 : vector<8x32xbf16>, vector<8x1xbf16> -> vector<8x33xbf16>
    %cst_48 = arith.constant dense<0.000000e+00> : vector<8x96xf32>
    %189 = tpu.matmul %188, %0, %cst_48 {dimension_numbers = #tpu.dot_dimension_numbers<[1], [0], [0], [1], [0, 0, 1, 1], [], []>} : vector<8x33xbf16>, vector<33x96xbf16>, vector<8x96xf32> -> vector<8x96xf32>
    %190 = vector.extract_strided_slice %186 {offsets = [0, 0], sizes = [8, 32], strides = [1, 1]} : vector<8x96xf32> to vector<8x32xf32>
    %191 = vector.extract_strided_slice %189 {offsets = [0, 0], sizes = [8, 32], strides = [1, 1]} : vector<8x96xf32> to vector<8x32xf32>
    %192 = arith.addf %190, %191 : vector<8x32xf32>
    %193 = arith.negf %192 : vector<8x32xf32>
    %194 = math.exp %193 : vector<8x32xf32>
    %cst_49 = arith.constant 1.000000e+00 : f32
    %195 = vector.broadcast %cst_49 : f32 to vector<8x32xf32>
    %196 = arith.addf %195, %194 : vector<8x32xf32>
    %197 = arith.divf %195, %196 : vector<8x32xf32>
    %198 = vector.extract_strided_slice %186 {offsets = [0, 32], sizes = [8, 32], strides = [1, 1]} : vector<8x96xf32> to vector<8x32xf32>
    %199 = vector.extract_strided_slice %189 {offsets = [0, 32], sizes = [8, 32], strides = [1, 1]} : vector<8x96xf32> to vector<8x32xf32>
    %200 = arith.addf %198, %199 : vector<8x32xf32>
    %201 = arith.negf %200 : vector<8x32xf32>
    %202 = math.exp %201 : vector<8x32xf32>
    %cst_50 = arith.constant 1.000000e+00 : f32
    %203 = vector.broadcast %cst_50 : f32 to vector<8x32xf32>
    %204 = arith.addf %203, %202 : vector<8x32xf32>
    %205 = arith.divf %203, %204 : vector<8x32xf32>
    %206 = vector.extract_strided_slice %186 {offsets = [0, 64], sizes = [8, 32], strides = [1, 1]} : vector<8x96xf32> to vector<8x32xf32>
    %207 = vector.extract_strided_slice %189 {offsets = [0, 64], sizes = [8, 32], strides = [1, 1]} : vector<8x96xf32> to vector<8x32xf32>
    %208 = arith.mulf %197, %207 : vector<8x32xf32>
    %209 = arith.addf %206, %208 : vector<8x32xf32>
    %210 = math.tanh %209 : vector<8x32xf32>
    %cst_51 = arith.constant 1.000000e+00 : f32
    %211 = vector.broadcast %cst_51 : f32 to vector<8x32xf32>
    %212 = arith.subf %211, %205 : vector<8x32xf32>
    %213 = arith.mulf %212, %210 : vector<8x32xf32>
    %214 = arith.mulf %205, %157 : vector<8x32xf32>
    %215 = arith.addf %213, %214 : vector<8x32xf32>
    %216 = arith.truncf %215 : vector<8x32xf32> to vector<8x32xbf16>
    %217 = arith.truncf %179 : vector<8x32xf32> to vector<8x32xbf16>
    %218 = tpu.concatenate %216, %217, %2 in 1 : vector<8x32xbf16>, vector<8x32xbf16>, vector<8x1xbf16> -> vector<8x65xbf16>
    %cst_52 = arith.constant dense<0.000000e+00> : vector<8x128xf32>
    %219 = tpu.matmul %218, %1, %cst_52 {dimension_numbers = #tpu.dot_dimension_numbers<[1], [0], [0], [1], [0, 0, 1, 1], [], []>} : vector<8x65xbf16>, vector<65x128xbf16>, vector<8x128xf32> -> vector<8x128xf32>
    %220 = vector.extract_strided_slice %219 {offsets = [0, 0], sizes = [8, 64], strides = [1, 1]} : vector<8x128xf32> to vector<8x64xf32>
    %221 = arith.negf %220 : vector<8x64xf32>
    %222 = math.exp %221 : vector<8x64xf32>
    %cst_53 = arith.constant 1.000000e+00 : f32
    %223 = vector.broadcast %cst_53 : f32 to vector<8x64xf32>
    %224 = arith.addf %223, %222 : vector<8x64xf32>
    %225 = arith.divf %223, %224 : vector<8x64xf32>
    %226 = vector.extract_strided_slice %225 {offsets = [0, 0], sizes = [8, 32], strides = [1, 1]} : vector<8x64xf32> to vector<8x32xf32>
    %227 = vector.extract_strided_slice %225 {offsets = [0, 32], sizes = [8, 32], strides = [1, 1]} : vector<8x64xf32> to vector<8x32xf32>
    %228 = vector.extract_strided_slice %219 {offsets = [0, 64], sizes = [8, 32], strides = [1, 1]} : vector<8x128xf32> to vector<8x32xf32>
    %229 = vector.extract_strided_slice %219 {offsets = [0, 96], sizes = [8, 32], strides = [1, 1]} : vector<8x128xf32> to vector<8x32xf32>
    %230 = arith.mulf %226, %229 : vector<8x32xf32>
    %231 = arith.addf %228, %230 : vector<8x32xf32>
    %232 = math.tanh %231 : vector<8x32xf32>
    %cst_54 = arith.constant 1.000000e+00 : f32
    %233 = vector.broadcast %cst_54 : f32 to vector<8x32xf32>
    %234 = arith.subf %233, %227 : vector<8x32xf32>
    %235 = arith.mulf %234, %232 : vector<8x32xf32>
    %236 = arith.mulf %227, %179 : vector<8x32xf32>
    %237 = arith.addf %235, %236 : vector<8x32xf32>
    %238 = arith.index_cast %c3_i32 : i32 to index
    %c0_55 = arith.constant 0 : index
    %c0_56 = arith.constant 0 : index
    %239 = vector.load %arg9[%238, %c0_55, %c0_56] : memref<8x8x32xf32, #tpu.memory_space<vmem>>, vector<1x8x32xf32>
    %240 = vector.shape_cast %239 : vector<1x8x32xf32> to vector<8x32xf32>
    %241 = vector.shape_cast %237 : vector<8x32xf32> to vector<1x8x32xf32>
    tpu.vector_store %arg9[%238, %c0_55, %c0_56], %241 {strides = array<i32>} : memref<8x8x32xf32, #tpu.memory_space<vmem>>, vector<1x8x32xf32>,
    %c4_i32 = arith.constant 4 : i32
    %242 = arith.index_cast %c4_i32 : i32 to index
    %c0_57 = arith.constant 0 : index
    %c0_58 = arith.constant 0 : index
    %243 = vector.load %arg8[%242, %c0_57, %c0_58] : memref<8x8x96xf32, #tpu.memory_space<vmem>>, vector<1x8x96xf32>
    %244 = vector.shape_cast %243 : vector<1x8x96xf32> to vector<8x96xf32>
    %245 = arith.truncf %215 : vector<8x32xf32> to vector<8x32xbf16>
    %246 = tpu.concatenate %245, %2 in 1 : vector<8x32xbf16>, vector<8x1xbf16> -> vector<8x33xbf16>
    %cst_59 = arith.constant dense<0.000000e+00> : vector<8x96xf32>
    %247 = tpu.matmul %246, %0, %cst_59 {dimension_numbers = #tpu.dot_dimension_numbers<[1], [0], [0], [1], [0, 0, 1, 1], [], []>} : vector<8x33xbf16>, vector<33x96xbf16>, vector<8x96xf32> -> vector<8x96xf32>
    %248 = vector.extract_strided_slice %244 {offsets = [0, 0], sizes = [8, 32], strides = [1, 1]} : vector<8x96xf32> to vector<8x32xf32>
    %249 = vector.extract_strided_slice %247 {offsets = [0, 0], sizes = [8, 32], strides = [1, 1]} : vector<8x96xf32> to vector<8x32xf32>
    %250 = arith.addf %248, %249 : vector<8x32xf32>
    %251 = arith.negf %250 : vector<8x32xf32>
    %252 = math.exp %251 : vector<8x32xf32>
    %cst_60 = arith.constant 1.000000e+00 : f32
    %253 = vector.broadcast %cst_60 : f32 to vector<8x32xf32>
    %254 = arith.addf %253, %252 : vector<8x32xf32>
    %255 = arith.divf %253, %254 : vector<8x32xf32>
    %256 = vector.extract_strided_slice %244 {offsets = [0, 32], sizes = [8, 32], strides = [1, 1]} : vector<8x96xf32> to vector<8x32xf32>
    %257 = vector.extract_strided_slice %247 {offsets = [0, 32], sizes = [8, 32], strides = [1, 1]} : vector<8x96xf32> to vector<8x32xf32>
    %258 = arith.addf %256, %257 : vector<8x32xf32>
    %259 = arith.negf %258 : vector<8x32xf32>
    %260 = math.exp %259 : vector<8x32xf32>
    %cst_61 = arith.constant 1.000000e+00 : f32
    %261 = vector.broadcast %cst_61 : f32 to vector<8x32xf32>
    %262 = arith.addf %261, %260 : vector<8x32xf32>
    %263 = arith.divf %261, %262 : vector<8x32xf32>
    %264 = vector.extract_strided_slice %244 {offsets = [0, 64], sizes = [8, 32], strides = [1, 1]} : vector<8x96xf32> to vector<8x32xf32>
    %265 = vector.extract_strided_slice %247 {offsets = [0, 64], sizes = [8, 32], strides = [1, 1]} : vector<8x96xf32> to vector<8x32xf32>
    %266 = arith.mulf %255, %265 : vector<8x32xf32>
    %267 = arith.addf %264, %266 : vector<8x32xf32>
    %268 = math.tanh %267 : vector<8x32xf32>
    %cst_62 = arith.constant 1.000000e+00 : f32
    %269 = vector.broadcast %cst_62 : f32 to vector<8x32xf32>
    %270 = arith.subf %269, %263 : vector<8x32xf32>
    %271 = arith.mulf %270, %268 : vector<8x32xf32>
    %272 = arith.mulf %263, %215 : vector<8x32xf32>
    %273 = arith.addf %271, %272 : vector<8x32xf32>
    %274 = arith.truncf %273 : vector<8x32xf32> to vector<8x32xbf16>
    %275 = arith.truncf %237 : vector<8x32xf32> to vector<8x32xbf16>
    %276 = tpu.concatenate %274, %275, %2 in 1 : vector<8x32xbf16>, vector<8x32xbf16>, vector<8x1xbf16> -> vector<8x65xbf16>
    %cst_63 = arith.constant dense<0.000000e+00> : vector<8x128xf32>
    %277 = tpu.matmul %276, %1, %cst_63 {dimension_numbers = #tpu.dot_dimension_numbers<[1], [0], [0], [1], [0, 0, 1, 1], [], []>} : vector<8x65xbf16>, vector<65x128xbf16>, vector<8x128xf32> -> vector<8x128xf32>
    %278 = vector.extract_strided_slice %277 {offsets = [0, 0], sizes = [8, 64], strides = [1, 1]} : vector<8x128xf32> to vector<8x64xf32>
    %279 = arith.negf %278 : vector<8x64xf32>
    %280 = math.exp %279 : vector<8x64xf32>
    %cst_64 = arith.constant 1.000000e+00 : f32
    %281 = vector.broadcast %cst_64 : f32 to vector<8x64xf32>
    %282 = arith.addf %281, %280 : vector<8x64xf32>
    %283 = arith.divf %281, %282 : vector<8x64xf32>
    %284 = vector.extract_strided_slice %283 {offsets = [0, 0], sizes = [8, 32], strides = [1, 1]} : vector<8x64xf32> to vector<8x32xf32>
    %285 = vector.extract_strided_slice %283 {offsets = [0, 32], sizes = [8, 32], strides = [1, 1]} : vector<8x64xf32> to vector<8x32xf32>
    %286 = vector.extract_strided_slice %277 {offsets = [0, 64], sizes = [8, 32], strides = [1, 1]} : vector<8x128xf32> to vector<8x32xf32>
    %287 = vector.extract_strided_slice %277 {offsets = [0, 96], sizes = [8, 32], strides = [1, 1]} : vector<8x128xf32> to vector<8x32xf32>
    %288 = arith.mulf %284, %287 : vector<8x32xf32>
    %289 = arith.addf %286, %288 : vector<8x32xf32>
    %290 = math.tanh %289 : vector<8x32xf32>
    %cst_65 = arith.constant 1.000000e+00 : f32
    %291 = vector.broadcast %cst_65 : f32 to vector<8x32xf32>
    %292 = arith.subf %291, %285 : vector<8x32xf32>
    %293 = arith.mulf %292, %290 : vector<8x32xf32>
    %294 = arith.mulf %285, %237 : vector<8x32xf32>
    %295 = arith.addf %293, %294 : vector<8x32xf32>
    %296 = arith.index_cast %c4_i32 : i32 to index
    %c0_66 = arith.constant 0 : index
    %c0_67 = arith.constant 0 : index
    %297 = vector.load %arg9[%296, %c0_66, %c0_67] : memref<8x8x32xf32, #tpu.memory_space<vmem>>, vector<1x8x32xf32>
    %298 = vector.shape_cast %297 : vector<1x8x32xf32> to vector<8x32xf32>
    %299 = vector.shape_cast %295 : vector<8x32xf32> to vector<1x8x32xf32>
    tpu.vector_store %arg9[%296, %c0_66, %c0_67], %299 {strides = array<i32>} : memref<8x8x32xf32, #tpu.memory_space<vmem>>, vector<1x8x32xf32>,
    %c5_i32 = arith.constant 5 : i32
    %300 = arith.index_cast %c5_i32 : i32 to index
    %c0_68 = arith.constant 0 : index
    %c0_69 = arith.constant 0 : index
    %301 = vector.load %arg8[%300, %c0_68, %c0_69] : memref<8x8x96xf32, #tpu.memory_space<vmem>>, vector<1x8x96xf32>
    %302 = vector.shape_cast %301 : vector<1x8x96xf32> to vector<8x96xf32>
    %303 = arith.truncf %273 : vector<8x32xf32> to vector<8x32xbf16>
    %304 = tpu.concatenate %303, %2 in 1 : vector<8x32xbf16>, vector<8x1xbf16> -> vector<8x33xbf16>
    %cst_70 = arith.constant dense<0.000000e+00> : vector<8x96xf32>
    %305 = tpu.matmul %304, %0, %cst_70 {dimension_numbers = #tpu.dot_dimension_numbers<[1], [0], [0], [1], [0, 0, 1, 1], [], []>} : vector<8x33xbf16>, vector<33x96xbf16>, vector<8x96xf32> -> vector<8x96xf32>
    %306 = vector.extract_strided_slice %302 {offsets = [0, 0], sizes = [8, 32], strides = [1, 1]} : vector<8x96xf32> to vector<8x32xf32>
    %307 = vector.extract_strided_slice %305 {offsets = [0, 0], sizes = [8, 32], strides = [1, 1]} : vector<8x96xf32> to vector<8x32xf32>
    %308 = arith.addf %306, %307 : vector<8x32xf32>
    %309 = arith.negf %308 : vector<8x32xf32>
    %310 = math.exp %309 : vector<8x32xf32>
    %cst_71 = arith.constant 1.000000e+00 : f32
    %311 = vector.broadcast %cst_71 : f32 to vector<8x32xf32>
    %312 = arith.addf %311, %310 : vector<8x32xf32>
    %313 = arith.divf %311, %312 : vector<8x32xf32>
    %314 = vector.extract_strided_slice %302 {offsets = [0, 32], sizes = [8, 32], strides = [1, 1]} : vector<8x96xf32> to vector<8x32xf32>
    %315 = vector.extract_strided_slice %305 {offsets = [0, 32], sizes = [8, 32], strides = [1, 1]} : vector<8x96xf32> to vector<8x32xf32>
    %316 = arith.addf %314, %315 : vector<8x32xf32>
    %317 = arith.negf %316 : vector<8x32xf32>
    %318 = math.exp %317 : vector<8x32xf32>
    %cst_72 = arith.constant 1.000000e+00 : f32
    %319 = vector.broadcast %cst_72 : f32 to vector<8x32xf32>
    %320 = arith.addf %319, %318 : vector<8x32xf32>
    %321 = arith.divf %319, %320 : vector<8x32xf32>
    %322 = vector.extract_strided_slice %302 {offsets = [0, 64], sizes = [8, 32], strides = [1, 1]} : vector<8x96xf32> to vector<8x32xf32>
    %323 = vector.extract_strided_slice %305 {offsets = [0, 64], sizes = [8, 32], strides = [1, 1]} : vector<8x96xf32> to vector<8x32xf32>
    %324 = arith.mulf %313, %323 : vector<8x32xf32>
    %325 = arith.addf %322, %324 : vector<8x32xf32>
    %326 = math.tanh %325 : vector<8x32xf32>
    %cst_73 = arith.constant 1.000000e+00 : f32
    %327 = vector.broadcast %cst_73 : f32 to vector<8x32xf32>
    %328 = arith.subf %327, %321 : vector<8x32xf32>
    %329 = arith.mulf %328, %326 : vector<8x32xf32>
    %330 = arith.mulf %321, %273 : vector<8x32xf32>
    %331 = arith.addf %329, %330 : vector<8x32xf32>
    %332 = arith.truncf %331 : vector<8x32xf32> to vector<8x32xbf16>
    %333 = arith.truncf %295 : vector<8x32xf32> to vector<8x32xbf16>
    %334 = tpu.concatenate %332, %333, %2 in 1 : vector<8x32xbf16>, vector<8x32xbf16>, vector<8x1xbf16> -> vector<8x65xbf16>
    %cst_74 = arith.constant dense<0.000000e+00> : vector<8x128xf32>
    %335 = tpu.matmul %334, %1, %cst_74 {dimension_numbers = #tpu.dot_dimension_numbers<[1], [0], [0], [1], [0, 0, 1, 1], [], []>} : vector<8x65xbf16>, vector<65x128xbf16>, vector<8x128xf32> -> vector<8x128xf32>
    %336 = vector.extract_strided_slice %335 {offsets = [0, 0], sizes = [8, 64], strides = [1, 1]} : vector<8x128xf32> to vector<8x64xf32>
    %337 = arith.negf %336 : vector<8x64xf32>
    %338 = math.exp %337 : vector<8x64xf32>
    %cst_75 = arith.constant 1.000000e+00 : f32
    %339 = vector.broadcast %cst_75 : f32 to vector<8x64xf32>
    %340 = arith.addf %339, %338 : vector<8x64xf32>
    %341 = arith.divf %339, %340 : vector<8x64xf32>
    %342 = vector.extract_strided_slice %341 {offsets = [0, 0], sizes = [8, 32], strides = [1, 1]} : vector<8x64xf32> to vector<8x32xf32>
    %343 = vector.extract_strided_slice %341 {offsets = [0, 32], sizes = [8, 32], strides = [1, 1]} : vector<8x64xf32> to vector<8x32xf32>
    %344 = vector.extract_strided_slice %335 {offsets = [0, 64], sizes = [8, 32], strides = [1, 1]} : vector<8x128xf32> to vector<8x32xf32>
    %345 = vector.extract_strided_slice %335 {offsets = [0, 96], sizes = [8, 32], strides = [1, 1]} : vector<8x128xf32> to vector<8x32xf32>
    %346 = arith.mulf %342, %345 : vector<8x32xf32>
    %347 = arith.addf %344, %346 : vector<8x32xf32>
    %348 = math.tanh %347 : vector<8x32xf32>
    %cst_76 = arith.constant 1.000000e+00 : f32
    %349 = vector.broadcast %cst_76 : f32 to vector<8x32xf32>
    %350 = arith.subf %349, %343 : vector<8x32xf32>
    %351 = arith.mulf %350, %348 : vector<8x32xf32>
    %352 = arith.mulf %343, %295 : vector<8x32xf32>
    %353 = arith.addf %351, %352 : vector<8x32xf32>
    %354 = arith.index_cast %c5_i32 : i32 to index
    %c0_77 = arith.constant 0 : index
    %c0_78 = arith.constant 0 : index
    %355 = vector.load %arg9[%354, %c0_77, %c0_78] : memref<8x8x32xf32, #tpu.memory_space<vmem>>, vector<1x8x32xf32>
    %356 = vector.shape_cast %355 : vector<1x8x32xf32> to vector<8x32xf32>
    %357 = vector.shape_cast %353 : vector<8x32xf32> to vector<1x8x32xf32>
    tpu.vector_store %arg9[%354, %c0_77, %c0_78], %357 {strides = array<i32>} : memref<8x8x32xf32, #tpu.memory_space<vmem>>, vector<1x8x32xf32>,
    %c6_i32 = arith.constant 6 : i32
    %358 = arith.index_cast %c6_i32 : i32 to index
    %c0_79 = arith.constant 0 : index
    %c0_80 = arith.constant 0 : index
    %359 = vector.load %arg8[%358, %c0_79, %c0_80] : memref<8x8x96xf32, #tpu.memory_space<vmem>>, vector<1x8x96xf32>
    %360 = vector.shape_cast %359 : vector<1x8x96xf32> to vector<8x96xf32>
    %361 = arith.truncf %331 : vector<8x32xf32> to vector<8x32xbf16>
    %362 = tpu.concatenate %361, %2 in 1 : vector<8x32xbf16>, vector<8x1xbf16> -> vector<8x33xbf16>
    %cst_81 = arith.constant dense<0.000000e+00> : vector<8x96xf32>
    %363 = tpu.matmul %362, %0, %cst_81 {dimension_numbers = #tpu.dot_dimension_numbers<[1], [0], [0], [1], [0, 0, 1, 1], [], []>} : vector<8x33xbf16>, vector<33x96xbf16>, vector<8x96xf32> -> vector<8x96xf32>
    %364 = vector.extract_strided_slice %360 {offsets = [0, 0], sizes = [8, 32], strides = [1, 1]} : vector<8x96xf32> to vector<8x32xf32>
    %365 = vector.extract_strided_slice %363 {offsets = [0, 0], sizes = [8, 32], strides = [1, 1]} : vector<8x96xf32> to vector<8x32xf32>
    %366 = arith.addf %364, %365 : vector<8x32xf32>
    %367 = arith.negf %366 : vector<8x32xf32>
    %368 = math.exp %367 : vector<8x32xf32>
    %cst_82 = arith.constant 1.000000e+00 : f32
    %369 = vector.broadcast %cst_82 : f32 to vector<8x32xf32>
    %370 = arith.addf %369, %368 : vector<8x32xf32>
    %371 = arith.divf %369, %370 : vector<8x32xf32>
    %372 = vector.extract_strided_slice %360 {offsets = [0, 32], sizes = [8, 32], strides = [1, 1]} : vector<8x96xf32> to vector<8x32xf32>
    %373 = vector.extract_strided_slice %363 {offsets = [0, 32], sizes = [8, 32], strides = [1, 1]} : vector<8x96xf32> to vector<8x32xf32>
    %374 = arith.addf %372, %373 : vector<8x32xf32>
    %375 = arith.negf %374 : vector<8x32xf32>
    %376 = math.exp %375 : vector<8x32xf32>
    %cst_83 = arith.constant 1.000000e+00 : f32
    %377 = vector.broadcast %cst_83 : f32 to vector<8x32xf32>
    %378 = arith.addf %377, %376 : vector<8x32xf32>
    %379 = arith.divf %377, %378 : vector<8x32xf32>
    %380 = vector.extract_strided_slice %360 {offsets = [0, 64], sizes = [8, 32], strides = [1, 1]} : vector<8x96xf32> to vector<8x32xf32>
    %381 = vector.extract_strided_slice %363 {offsets = [0, 64], sizes = [8, 32], strides = [1, 1]} : vector<8x96xf32> to vector<8x32xf32>
    %382 = arith.mulf %371, %381 : vector<8x32xf32>
    %383 = arith.addf %380, %382 : vector<8x32xf32>
    %384 = math.tanh %383 : vector<8x32xf32>
    %cst_84 = arith.constant 1.000000e+00 : f32
    %385 = vector.broadcast %cst_84 : f32 to vector<8x32xf32>
    %386 = arith.subf %385, %379 : vector<8x32xf32>
    %387 = arith.mulf %386, %384 : vector<8x32xf32>
    %388 = arith.mulf %379, %331 : vector<8x32xf32>
    %389 = arith.addf %387, %388 : vector<8x32xf32>
    %390 = arith.truncf %389 : vector<8x32xf32> to vector<8x32xbf16>
    %391 = arith.truncf %353 : vector<8x32xf32> to vector<8x32xbf16>
    %392 = tpu.concatenate %390, %391, %2 in 1 : vector<8x32xbf16>, vector<8x32xbf16>, vector<8x1xbf16> -> vector<8x65xbf16>
    %cst_85 = arith.constant dense<0.000000e+00> : vector<8x128xf32>
    %393 = tpu.matmul %392, %1, %cst_85 {dimension_numbers = #tpu.dot_dimension_numbers<[1], [0], [0], [1], [0, 0, 1, 1], [], []>} : vector<8x65xbf16>, vector<65x128xbf16>, vector<8x128xf32> -> vector<8x128xf32>
    %394 = vector.extract_strided_slice %393 {offsets = [0, 0], sizes = [8, 64], strides = [1, 1]} : vector<8x128xf32> to vector<8x64xf32>
    %395 = arith.negf %394 : vector<8x64xf32>
    %396 = math.exp %395 : vector<8x64xf32>
    %cst_86 = arith.constant 1.000000e+00 : f32
    %397 = vector.broadcast %cst_86 : f32 to vector<8x64xf32>
    %398 = arith.addf %397, %396 : vector<8x64xf32>
    %399 = arith.divf %397, %398 : vector<8x64xf32>
    %400 = vector.extract_strided_slice %399 {offsets = [0, 0], sizes = [8, 32], strides = [1, 1]} : vector<8x64xf32> to vector<8x32xf32>
    %401 = vector.extract_strided_slice %399 {offsets = [0, 32], sizes = [8, 32], strides = [1, 1]} : vector<8x64xf32> to vector<8x32xf32>
    %402 = vector.extract_strided_slice %393 {offsets = [0, 64], sizes = [8, 32], strides = [1, 1]} : vector<8x128xf32> to vector<8x32xf32>
    %403 = vector.extract_strided_slice %393 {offsets = [0, 96], sizes = [8, 32], strides = [1, 1]} : vector<8x128xf32> to vector<8x32xf32>
    %404 = arith.mulf %400, %403 : vector<8x32xf32>
    %405 = arith.addf %402, %404 : vector<8x32xf32>
    %406 = math.tanh %405 : vector<8x32xf32>
    %cst_87 = arith.constant 1.000000e+00 : f32
    %407 = vector.broadcast %cst_87 : f32 to vector<8x32xf32>
    %408 = arith.subf %407, %401 : vector<8x32xf32>
    %409 = arith.mulf %408, %406 : vector<8x32xf32>
    %410 = arith.mulf %401, %353 : vector<8x32xf32>
    %411 = arith.addf %409, %410 : vector<8x32xf32>
    %412 = arith.index_cast %c6_i32 : i32 to index
    %c0_88 = arith.constant 0 : index
    %c0_89 = arith.constant 0 : index
    %413 = vector.load %arg9[%412, %c0_88, %c0_89] : memref<8x8x32xf32, #tpu.memory_space<vmem>>, vector<1x8x32xf32>
    %414 = vector.shape_cast %413 : vector<1x8x32xf32> to vector<8x32xf32>
    %415 = vector.shape_cast %411 : vector<8x32xf32> to vector<1x8x32xf32>
    tpu.vector_store %arg9[%412, %c0_88, %c0_89], %415 {strides = array<i32>} : memref<8x8x32xf32, #tpu.memory_space<vmem>>, vector<1x8x32xf32>,
    %c7_i32 = arith.constant 7 : i32
    %416 = arith.index_cast %c7_i32 : i32 to index
    %c0_90 = arith.constant 0 : index
    %c0_91 = arith.constant 0 : index
    %417 = vector.load %arg8[%416, %c0_90, %c0_91] : memref<8x8x96xf32, #tpu.memory_space<vmem>>, vector<1x8x96xf32>
    %418 = vector.shape_cast %417 : vector<1x8x96xf32> to vector<8x96xf32>
    %419 = arith.truncf %389 : vector<8x32xf32> to vector<8x32xbf16>
    %420 = tpu.concatenate %419, %2 in 1 : vector<8x32xbf16>, vector<8x1xbf16> -> vector<8x33xbf16>
    %cst_92 = arith.constant dense<0.000000e+00> : vector<8x96xf32>
    %421 = tpu.matmul %420, %0, %cst_92 {dimension_numbers = #tpu.dot_dimension_numbers<[1], [0], [0], [1], [0, 0, 1, 1], [], []>} : vector<8x33xbf16>, vector<33x96xbf16>, vector<8x96xf32> -> vector<8x96xf32>
    %422 = vector.extract_strided_slice %418 {offsets = [0, 0], sizes = [8, 32], strides = [1, 1]} : vector<8x96xf32> to vector<8x32xf32>
    %423 = vector.extract_strided_slice %421 {offsets = [0, 0], sizes = [8, 32], strides = [1, 1]} : vector<8x96xf32> to vector<8x32xf32>
    %424 = arith.addf %422, %423 : vector<8x32xf32>
    %425 = arith.negf %424 : vector<8x32xf32>
    %426 = math.exp %425 : vector<8x32xf32>
    %cst_93 = arith.constant 1.000000e+00 : f32
    %427 = vector.broadcast %cst_93 : f32 to vector<8x32xf32>
    %428 = arith.addf %427, %426 : vector<8x32xf32>
    %429 = arith.divf %427, %428 : vector<8x32xf32>
    %430 = vector.extract_strided_slice %418 {offsets = [0, 32], sizes = [8, 32], strides = [1, 1]} : vector<8x96xf32> to vector<8x32xf32>
    %431 = vector.extract_strided_slice %421 {offsets = [0, 32], sizes = [8, 32], strides = [1, 1]} : vector<8x96xf32> to vector<8x32xf32>
    %432 = arith.addf %430, %431 : vector<8x32xf32>
    %433 = arith.negf %432 : vector<8x32xf32>
    %434 = math.exp %433 : vector<8x32xf32>
    %cst_94 = arith.constant 1.000000e+00 : f32
    %435 = vector.broadcast %cst_94 : f32 to vector<8x32xf32>
    %436 = arith.addf %435, %434 : vector<8x32xf32>
    %437 = arith.divf %435, %436 : vector<8x32xf32>
    %438 = vector.extract_strided_slice %418 {offsets = [0, 64], sizes = [8, 32], strides = [1, 1]} : vector<8x96xf32> to vector<8x32xf32>
    %439 = vector.extract_strided_slice %421 {offsets = [0, 64], sizes = [8, 32], strides = [1, 1]} : vector<8x96xf32> to vector<8x32xf32>
    %440 = arith.mulf %429, %439 : vector<8x32xf32>
    %441 = arith.addf %438, %440 : vector<8x32xf32>
    %442 = math.tanh %441 : vector<8x32xf32>
    %cst_95 = arith.constant 1.000000e+00 : f32
    %443 = vector.broadcast %cst_95 : f32 to vector<8x32xf32>
    %444 = arith.subf %443, %437 : vector<8x32xf32>
    %445 = arith.mulf %444, %442 : vector<8x32xf32>
    %446 = arith.mulf %437, %389 : vector<8x32xf32>
    %447 = arith.addf %445, %446 : vector<8x32xf32>
    %448 = arith.truncf %447 : vector<8x32xf32> to vector<8x32xbf16>
    %449 = arith.truncf %411 : vector<8x32xf32> to vector<8x32xbf16>
    %450 = tpu.concatenate %448, %449, %2 in 1 : vector<8x32xbf16>, vector<8x32xbf16>, vector<8x1xbf16> -> vector<8x65xbf16>
    %cst_96 = arith.constant dense<0.000000e+00> : vector<8x128xf32>
    %451 = tpu.matmul %450, %1, %cst_96 {dimension_numbers = #tpu.dot_dimension_numbers<[1], [0], [0], [1], [0, 0, 1, 1], [], []>} : vector<8x65xbf16>, vector<65x128xbf16>, vector<8x128xf32> -> vector<8x128xf32>
    %452 = vector.extract_strided_slice %451 {offsets = [0, 0], sizes = [8, 64], strides = [1, 1]} : vector<8x128xf32> to vector<8x64xf32>
    %453 = arith.negf %452 : vector<8x64xf32>
    %454 = math.exp %453 : vector<8x64xf32>
    %cst_97 = arith.constant 1.000000e+00 : f32
    %455 = vector.broadcast %cst_97 : f32 to vector<8x64xf32>
    %456 = arith.addf %455, %454 : vector<8x64xf32>
    %457 = arith.divf %455, %456 : vector<8x64xf32>
    %458 = vector.extract_strided_slice %457 {offsets = [0, 0], sizes = [8, 32], strides = [1, 1]} : vector<8x64xf32> to vector<8x32xf32>
    %459 = vector.extract_strided_slice %457 {offsets = [0, 32], sizes = [8, 32], strides = [1, 1]} : vector<8x64xf32> to vector<8x32xf32>
    %460 = vector.extract_strided_slice %451 {offsets = [0, 64], sizes = [8, 32], strides = [1, 1]} : vector<8x128xf32> to vector<8x32xf32>
    %461 = vector.extract_strided_slice %451 {offsets = [0, 96], sizes = [8, 32], strides = [1, 1]} : vector<8x128xf32> to vector<8x32xf32>
    %462 = arith.mulf %458, %461 : vector<8x32xf32>
    %463 = arith.addf %460, %462 : vector<8x32xf32>
    %464 = math.tanh %463 : vector<8x32xf32>
    %cst_98 = arith.constant 1.000000e+00 : f32
    %465 = vector.broadcast %cst_98 : f32 to vector<8x32xf32>
    %466 = arith.subf %465, %459 : vector<8x32xf32>
    %467 = arith.mulf %466, %464 : vector<8x32xf32>
    %468 = arith.mulf %459, %411 : vector<8x32xf32>
    %469 = arith.addf %467, %468 : vector<8x32xf32>
    %470 = arith.index_cast %c7_i32 : i32 to index
    %c0_99 = arith.constant 0 : index
    %c0_100 = arith.constant 0 : index
    %471 = vector.load %arg9[%470, %c0_99, %c0_100] : memref<8x8x32xf32, #tpu.memory_space<vmem>>, vector<1x8x32xf32>
    %472 = vector.shape_cast %471 : vector<1x8x32xf32> to vector<8x32xf32>
    %473 = vector.shape_cast %469 : vector<8x32xf32> to vector<1x8x32xf32>
    tpu.vector_store %arg9[%470, %c0_99, %c0_100], %473 {strides = array<i32>} : memref<8x8x32xf32, #tpu.memory_space<vmem>>, vector<1x8x32xf32>,
    %c8_i32 = arith.constant 8 : i32
    %c0_101 = arith.constant 0 : index
    %c0_102 = arith.constant 0 : index
    %c0_103 = arith.constant 0 : index
    %474 = vector.load %arg9[%c0_101, %c0_102, %c0_103] : memref<8x8x32xf32, #tpu.memory_space<vmem>>, vector<8x8x32xf32>
    %c0_104 = arith.constant 0 : index
    %c0_105 = arith.constant 0 : index
    %c0_106 = arith.constant 0 : index
    %475 = vector.load %arg2[%c0_104, %c0_105, %c0_106] : memref<8x8x1xf32, #tpu.memory_space<vmem>>, vector<8x8x1xf32>
    %476 = vector.broadcast %475 : vector<8x8x1xf32> to vector<8x8x32xf32>
    %477 = arith.mulf %474, %476 : vector<8x8x32xf32>
    %478 = vector.shape_cast %477 : vector<8x8x32xf32> to vector<64x32xf32>
    %c0_107 = arith.constant 0 : index
    %c0_108 = arith.constant 0 : index
    %479 = vector.load %arg6[%c0_107, %c0_108] : memref<32x64xf32, #tpu.memory_space<vmem>>, vector<32x64xf32>
    %cst_109 = arith.constant dense<0.000000e+00> : vector<64x64xf32>
    %480 = tpu.matmul %478, %479, %cst_109 {dimension_numbers = #tpu.dot_dimension_numbers<[1], [0], [0], [1], [0, 0, 1, 1], [], []>} : vector<64x32xf32>, vector<32x64xf32>, vector<64x64xf32> -> vector<64x64xf32>
    %481 = vector.shape_cast %480 : vector<64x64xf32> to vector<8x8x64xf32>
    %c0_110 = arith.constant 0 : index
    %c0_111 = arith.constant 0 : index
    %c0_112 = arith.constant 0 : index
    %482 = vector.load %arg7[%c0_110, %c0_111, %c0_112] : memref<8x8x64xf32, #tpu.memory_space<vmem>>, vector<8x8x64xf32>
    tpu.vector_store %arg7[%c0_110, %c0_111, %c0_112], %481 {strides = array<i32>} : memref<8x8x64xf32, #tpu.memory_space<vmem>>, vector<8x8x64xf32>,
    return
  }
  func.func @transform_0(%arg0: i32) -> (i32, i32, i32) {
    %c0_i32 = arith.constant 0 : i32
    %c0_i32_0 = arith.constant 0 : i32
    %c0_i32_1 = arith.constant 0 : i32
    return %c0_i32, %arg0, %c0_i32_0 : i32, i32, i32
  }
  func.func @transform_1(%arg0: i32) -> (i32, i32, i32) {
    %c0_i32 = arith.constant 0 : i32
    %c0_i32_0 = arith.constant 0 : i32
    %c0_i32_1 = arith.constant 0 : i32
    return %c0_i32, %arg0, %c0_i32_0 : i32, i32, i32
  }
  func.func @transform_2(%arg0: i32) -> (i32, i32) {
    %c0_i32 = arith.constant 0 : i32
    %c0_i32_0 = arith.constant 0 : i32
    %c0_i32_1 = arith.constant 0 : i32
    return %c0_i32, %c0_i32_0 : i32, i32
  }
  func.func @transform_3(%arg0: i32) -> (i32, i32) {
    %c0_i32 = arith.constant 0 : i32
    %c0_i32_0 = arith.constant 0 : i32
    %c0_i32_1 = arith.constant 0 : i32
    return %c0_i32, %c0_i32_0 : i32, i32
  }
  func.func @transform_4(%arg0: i32) -> (i32, i32) {
    %c0_i32 = arith.constant 0 : i32
    %c0_i32_0 = arith.constant 0 : i32
    %c0_i32_1 = arith.constant 0 : i32
    return %c0_i32, %c0_i32_0 : i32, i32
  }
  func.func @transform_5(%arg0: i32) -> (i32, i32) {
    %c0_i32 = arith.constant 0 : i32
    %c0_i32_0 = arith.constant 0 : i32
    %c0_i32_1 = arith.constant 0 : i32
    return %c0_i32, %c0_i32_0 : i32, i32
  }
  func.func @transform_6(%arg0: i32) -> (i32, i32, i32) {
    %c0_i32 = arith.constant 0 : i32
    %c0_i32_0 = arith.constant 0 : i32
    %c0_i32_1 = arith.constant 0 : i32
    return %c0_i32, %arg0, %c0_i32_0 : i32, i32, i32
  }
}

</mosaic_0001>

<llo_original>
// kernel: tpu_custom_call.1
$region0: #{tpu_custom_call.1}
  #allocation0 [shape = 'u32[]', space=smem, size = 0x4, offset = 0x4, fixed_abs, tag = 'smem constant byte address 0x4 - core index']
  #allocation1 [shape = 'u32[144,128]{1,0:T(1,128)}', space=vmem, size = 0x12000, scoped, tag = 'internal scratch']
  #allocation2 [shape = 'f32[8,8,96]{2,1,0:T(8,128)}', space=vmem, size = 0x8000, scoped, tag = 'scratch operand']
  #allocation3 [shape = 'f32[8,8,32]{2,1,0:T(8,128)}', space=vmem, size = 0x8000, scoped, tag = 'scratch operand']
  %s0 = inlined_call_operand.hbm [shape: bf16[8,8,65], index: 0, kind: input, shape index: {}]
  %s1 = inlined_call_operand.vmem [shape: f32[8,8,1], index: 1, kind: input, shape index: {}]
  %s2 = inlined_call_operand.vmem [shape: bf16[65,96], index: 2, kind: input, shape index: {}]
  %s3 = inlined_call_operand.hbm [shape: bf16[33,96], index: 3, kind: input, shape index: {}]
  %s4 = inlined_call_operand.vmem [shape: bf16[65,128], index: 4, kind: input, shape index: {}]
  %s5 = inlined_call_operand.hbm [shape: f32[32,64], index: 5, kind: input, shape index: {}]
  %s6 = inlined_call_operand.hbm [shape: f32[8,8,64], index: 6, kind: output, shape index: {}]
  %s7 = sld [smem:[#allocation0]]
  $region46: #{tpu_custom_call.1} parent=0
    _
  %s9 = ssub.s32 1, %s7
  %s10 = scalar_select 0, %s9, %s7
  $region1: #{tpu_custom_call.1} parent=0
    #allocation4 [shape = 'u8[16384]{0}', space=vmem, size = 0x4000, scoped, tag = 'input window, operand 0, single buffered']
    #allocation5 [shape = 's32[1]{0}', space=sflag, size = 0x4, scoped, tag = 'scoped memory for tpu_custom_call.1']
    #allocation6 [shape = 's32[1]{0}', space=sflag, size = 0x4, scoped, tag = 'scoped memory for tpu_custom_call.1']
    #allocation7 [shape = 'u8[10240]{0}', space=vmem, size = 0x2800, scoped, tag = 'input window, operand 3, single buffered']
    #allocation8 [shape = 's32[1]{0}', space=sflag, size = 0x4, scoped, tag = 'scoped memory for tpu_custom_call.1']
    #allocation9 [shape = 'u8[16384]{0}', space=vmem, size = 0x4000, scoped, tag = 'input window, operand 5, single buffered']
    #allocation10 [shape = 'u8[32768]{0}', space=vmem, size = 0x8000, scoped, tag = 'output window, operand 0, single buffered']
    %11 = vsyncpa [#allocation5], 0
    %12 = vsyncpa [#allocation8], 0
    %13 = vsyncpa [#allocation6], 0
    // Predicated region
    $region2: #{tpu_custom_call.1} parent=1 // pred_check
      _
    $region3: #{tpu_custom_call.1} parent=1 // pred_check_branch
      %15 = sbr.rel (0) target = $region5
    $region4: #{tpu_custom_call.1} parent=1 // pred_region
      %s17 = ssub.s32 512, 512
      %18 = vsyncadd [#allocation5], %s17
      %s19 = sshll.u32 [#allocation4], 4
      %s20 = int_to_ptr.vmem [resolvable:$true] %s19
      %25 = dma.hbm_to_vmem [thread:$0]  %s0, 512, %s20, [#allocation5], 64, 64, 4
    $region5: #{tpu_custom_call.1} parent=1 // pred_fallthru
      _
    // Predicated region
    $region6: #{tpu_custom_call.1} parent=1 // pred_check
      _
    $region7: #{tpu_custom_call.1} parent=1 // pred_check_branch
      %27 = sbr.rel (0) target = $region9
    $region8: #{tpu_custom_call.1} parent=1 // pred_region
      _
    $region9: #{tpu_custom_call.1} parent=1 // pred_fallthru
      _
    // Predicated region
    $region10: #{tpu_custom_call.1} parent=1 // pred_check
      _
    $region11: #{tpu_custom_call.1} parent=1 // pred_check_branch
      %29 = sbr.rel (0) target = $region13
    $region12: #{tpu_custom_call.1} parent=1 // pred_region
      _
    $region13: #{tpu_custom_call.1} parent=1 // pred_fallthru
      _
    // Predicated region
    $region14: #{tpu_custom_call.1} parent=1 // pred_check
      _
    $region15: #{tpu_custom_call.1} parent=1 // pred_check_branch
      %31 = sbr.rel (0) target = $region17
    $region16: #{tpu_custom_call.1} parent=1 // pred_region
      %s33 = ssub.s32 320, 320
      %34 = vsyncadd [#allocation8], %s33
      %s35 = sshll.u32 [#allocation7], 4
      %s36 = int_to_ptr.vmem [resolvable:$true] %s35
      %41 = dma.hbm_to_vmem [thread:$0]  %s3, 320, %s36, [#allocation8], 64, 64, 4
    $region17: #{tpu_custom_call.1} parent=1 // pred_fallthru
      _
    // Predicated region
    $region18: #{tpu_custom_call.1} parent=1 // pred_check
      _
    $region19: #{tpu_custom_call.1} parent=1 // pred_check_branch
      %43 = sbr.rel (0) target = $region21
    $region20: #{tpu_custom_call.1} parent=1 // pred_region
      _
    $region21: #{tpu_custom_call.1} parent=1 // pred_fallthru
      _
    // Predicated region
    $region22: #{tpu_custom_call.1} parent=1 // pred_check
      _
    $region23: #{tpu_custom_call.1} parent=1 // pred_check_branch
      %45 = sbr.rel (0) target = $region25
    $region24: #{tpu_custom_call.1} parent=1 // pred_region
      %s47 = ssub.s32 512, 512
      %48 = vsyncadd [#allocation8], %s47
      %s49 = sshll.u32 [#allocation9], 4
      %s50 = int_to_ptr.vmem [resolvable:$true] %s49
      %55 = dma.hbm_to_vmem [thread:$0]  %s5, 512, %s50, [#allocation8], 128, 128, 8
    $region25: #{tpu_custom_call.1} parent=1 // pred_fallthru
      _
    // Predicated region
    $region26: #{tpu_custom_call.1} parent=1 // pred_check
      _
    $region27: #{tpu_custom_call.1} parent=1 // pred_check_branch
      %57 = sbr.rel (0) target = $region29
    $region28: #{tpu_custom_call.1} parent=1 // pred_region
      %58 = dma.done [#allocation5], 512
    $region29: #{tpu_custom_call.1} parent=1 // pred_fallthru
      _
    // Predicated region
    $region30: #{tpu_custom_call.1} parent=1 // pred_check
      _
    $region31: #{tpu_custom_call.1} parent=1 // pred_check_branch
      %60 = sbr.rel (0) target = $region33
    $region32: #{tpu_custom_call.1} parent=1 // pred_region
      %61 = dma.done [#allocation8], 320
    $region33: #{tpu_custom_call.1} parent=1 // pred_fallthru
      _
    // Predicated region
    $region34: #{tpu_custom_call.1} parent=1 // pred_check
      _
    $region35: #{tpu_custom_call.1} parent=1 // pred_check_branch
      %63 = sbr.rel (0) target = $region37
    $region36: #{tpu_custom_call.1} parent=1 // pred_region
      %64 = dma.done [#allocation8], 512
    $region37: #{tpu_custom_call.1} parent=1 // pred_fallthru
      _
    %v67 = vld [vmem:[#allocation7] sm:$0xf]
    %v68 = vld [vmem:[#allocation7 + $0x4] sm:$0xf]
    %v69 = vld [vmem:[#allocation7 + $0x8] sm:$0xf]
    %v70 = vld [vmem:[#allocation7 + $0xc] sm:$0xf]
    %v71 = vld [vmem:[#allocation7 + $0x10] sm:$0x1]
    %v72 = vld [vmem:[%s4] sm:$0xf]
    %v73 = vld [vmem:[%s4 + $0x4] sm:$0xf]
    %v74 = vld [vmem:[%s4 + $0x8] sm:$0xf]
    %v75 = vld [vmem:[%s4 + $0xc] sm:$0xf]
    %v76 = vld [vmem:[%s4 + $0x10] sm:$0xf]
    %v77 = vld [vmem:[%s4 + $0x14] sm:$0xf]
    %v78 = vld [vmem:[%s4 + $0x18] sm:$0xf]
    %v79 = vld [vmem:[%s4 + $0x1c] sm:$0xf]
    %v80 = vld [vmem:[%s4 + $0x20] sm:$0x1]
    %v81 = vld [vmem:[#allocation4] sm:$0xf]
    %v82 = vld [vmem:[#allocation4 + $0x4] sm:$0xf]
    %v83 = vld [vmem:[#allocation4 + $0x8] sm:$0xf]
    %v84 = vld [vmem:[#allocation4 + $0xc] sm:$0xf]
    %v85 = vld [vmem:[#allocation4 + $0x10] sm:$0xf]
    %v86 = vld [vmem:[#allocation4 + $0x14] sm:$0xf]
    %v87 = vld [vmem:[#allocation4 + $0x18] sm:$0xf]
    %v88 = vld [vmem:[#allocation4 + $0x1c] sm:$0xf]
    %v89 = vld [vmem:[%s2] sm:$0xf]
    %v90 = vld [vmem:[%s2 + $0x4] sm:$0xf]
    %v91 = vld [vmem:[%s2 + $0x8] sm:$0xf]
    %v92 = vld [vmem:[%s2 + $0xc] sm:$0xf]
    %v93 = vld [vmem:[%s2 + $0x10] sm:$0xf]
    %v94 = vld [vmem:[%s2 + $0x14] sm:$0xf]
    %v95 = vld [vmem:[%s2 + $0x18] sm:$0xf]
    %v96 = vld [vmem:[%s2 + $0x1c] sm:$0xf]
    %v97 = vld [vmem:[%s2 + $0x20] sm:$0x1]
    %v106 = vunpack.c.l.b16 %v81
    %v107 = vunpack.c.l.b16 %v82
    %v108 = vunpack.c.l.b16 %v83
    %v109 = vunpack.c.l.b16 %v84
    %v110 = vunpack.c.l.b16 %v85
    %v111 = vunpack.c.l.b16 %v86
    %v112 = vunpack.c.l.b16 %v87
    %v113 = vunpack.c.l.b16 %v88
    %v114 = vpack.c.b16 %v107, %v106
    %v115 = vpack.c.b16 %v109, %v108
    %v116 = vpack.c.b16 %v111, %v110
    %v117 = vpack.c.b16 %v113, %v112
    %v127 = vunpack.c.l.b16 %v89
    %v128 = vunpack.c.l.b16 %v90
    %v129 = vunpack.c.l.b16 %v91
    %v130 = vunpack.c.l.b16 %v92
    %v131 = vunpack.c.l.b16 %v93
    %v132 = vunpack.c.l.b16 %v94
    %v133 = vunpack.c.l.b16 %v95
    %v134 = vunpack.c.l.b16 %v96
    %v135 = vunpack.c.l.b16 %v97
    %v136 = vpack.c.b16 %v128, %v127
    %v137 = vpack.c.b16 %v130, %v129
    %v138 = vpack.c.b16 %v132, %v131
    %v139 = vpack.c.b16 %v134, %v133
    %v140 = vpack.c.b16 %v135, %v135
    %vm145 = vcmask 531456
    %v147 = vsel %vm145, %v114, 0
    %v150 = vsel %vm145, %v115, 0
    %v153 = vsel %vm145, %v116, 0
    %v156 = vsel %vm145, %v117, 0
    %vm158 = vcmask 1040384
    %v159 = vsel 0, 4294967295, 65535
    %v160 = vsel %vm158, %v159, 0
    %v162 = vand.u32 %v140, %v160
    %164 = vmatprep.subr.bf16.mxu0 0
    %165 = vmatpush1.bf16.msra.mxu0 %v136
    %166 = vmatprep.subr.bf16.mxu0 0
    %167 = vmatpush1.bf16.msra.mxu0 %v137
    %168 = vmatprep.subr.bf16.mxu0 0
    %169 = vmatpush1.bf16.msra.mxu0 %v138
    %170 = vmatprep.subr.bf16.mxu0 0
    %171 = vmatpush1.bf16.msra.mxu0 %v139
    %172 = vmatprep.subr.bf16.mxu0 0
    %173 = vmatpush1.bf16.msra.mxu0 %v162
    %174 = vmatprep.subr.bf16.mxu0 0
    %175 = vmatpush1.bf16.msra.mxu0 0
    %176 = vmatprep.subr.bf16.mxu0 0
    %177 = vmatpush1.bf16.msra.mxu0 0
    %178 = vmatprep.subr.bf16.mxu0 0
    %179 = vmatpush1.bf16.msra.mxu0 0
    %180 = vmatprep.subr.bf16.mxu0 0
    %181 = vmatpush1.bf16.msra.mxu0 0
    %182 = vmatprep.subr.bf16.mxu0 0
    %183 = vmatpush1.bf16.msra.mxu0 0
    %184 = vmatprep.subr.bf16.mxu0 0
    %185 = vmatpush1.bf16.msra.mxu0 0
    %186 = vmatprep.subr.bf16.mxu0 0
    %187 = vmatpush1.bf16.msra.mxu0 0
    %188 = vmatprep.subr.bf16.mxu0 0
    %189 = vmatpush1.bf16.msra.mxu0 0
    %190 = vmatprep.subr.bf16.mxu0 0
    %191 = vmatpush1.bf16.msra.mxu0 0
    %192 = vmatprep.subr.bf16.mxu0 0
    %193 = vmatpush1.bf16.msra.mxu0 0
    %194 = vmatprep.subr.bf16.mxu0 0
    %195 = vmatpush1.bf16.msra.mxu0 0
    %196 = vmatprep.mubr.bf16.mxu0 0
    %197 = vmatmul.mubr.bf16.gmra.mrb[0].mxu0 %v147
    %v198 = vpop.f32.mrb[0].mxu0
    %v199 = vadd.f32 0.0, %v198
    %v200 = vpop.f32.mrb[0].mxu0
    %v201 = vpop.f32.mrb[0].mxu0
    %v202 = vadd.f32 0.0, %v201
    %v203 = vpop.f32.mrb[0].mxu0
    %204 = vmatprep.mubr.bf16.mxu0 0
    %205 = vmatmul.mubr.bf16.gmra.mrb[0].mxu0 %v150
    %v206 = vpop.f32.mrb[0].mxu0
    %v207 = vadd.f32 0.0, %v206
    %v208 = vpop.f32.mrb[0].mxu0
    %v209 = vpop.f32.mrb[0].mxu0
    %v210 = vadd.f32 0.0, %v209
    %v211 = vpop.f32.mrb[0].mxu0
    %212 = vmatprep.mubr.bf16.mxu0 0
    %213 = vmatmul.mubr.bf16.gmra.mrb[0].mxu0 %v153
    %v214 = vpop.f32.mrb[0].mxu0
    %v215 = vadd.f32 0.0, %v214
    %v216 = vpop.f32.mrb[0].mxu0
    %v217 = vpop.f32.mrb[0].mxu0
    %v218 = vadd.f32 0.0, %v217
    %v219 = vpop.f32.mrb[0].mxu0
    %220 = vmatprep.mubr.bf16.mxu0 0
    %221 = vmatmul.mubr.bf16.gmra.mrb[0].mxu0 %v156
    %v222 = vpop.f32.mrb[0].mxu0
    %v223 = vadd.f32 0.0, %v222
    %v224 = vpop.f32.mrb[0].mxu0
    %v225 = vpop.f32.mrb[0].mxu0
    %v226 = vadd.f32 0.0, %v225
    %v227 = vpop.f32.mrb[0].mxu0
    %228 = vdwg.mxu0
    %vm229 = vcmask 785408
    %230 = vst.msk [vmem:[#allocation2] sm:$0xff] %vm229, %v199
    %231 = vst.msk [vmem:[#allocation2 + $0x8] sm:$0xff] %vm229, %v202
    %232 = vst.msk [vmem:[#allocation2 + $0x10] sm:$0xff] %vm229, %v207
    %233 = vst.msk [vmem:[#allocation2 + $0x18] sm:$0xff] %vm229, %v210
    %234 = vst.msk [vmem:[#allocation2 + $0x20] sm:$0xff] %vm229, %v215
    %235 = vst.msk [vmem:[#allocation2 + $0x28] sm:$0xff] %vm229, %v218
    %236 = vst.msk [vmem:[#allocation2 + $0x30] sm:$0xff] %vm229, %v223
    %237 = vst.msk [vmem:[#allocation2 + $0x38] sm:$0xff] %vm229, %v226
    %v238 = vld [vmem:[#allocation2] sm:$0xff]
    %vm239 = vcmask 261120
    %v242 = vsel %vm239, 0, 1065369472
    %v248 = vunpack.c.l.b16 %v67
    %v249 = vunpack.c.l.b16 %v68
    %v250 = vunpack.c.l.b16 %v69
    %v251 = vunpack.c.l.b16 %v70
    %v252 = vunpack.c.l.b16 %v71
    %v253 = vpack.c.b16 %v249, %v248
    %v254 = vpack.c.b16 %v251, %v250
    %v255 = vpack.c.b16 %v252, %v252
    %vm258 = vcmask 269312
    %v259 = vsel %vm258, %v242, 0
    %v262 = vand.u32 %v255, %v160
    %264 = vmatprep.subr.bf16.mxu0 0
    %265 = vmatpush1.bf16.msra.mxu0 %v253
    %266 = vmatprep.subr.bf16.mxu0 0
    %267 = vmatpush1.bf16.msra.mxu0 %v254
    %268 = vmatprep.subr.bf16.mxu0 0
    %269 = vmatpush1.bf16.msra.mxu0 %v262
    %270 = vmatprep.subr.bf16.mxu0 0
    %271 = vmatpush1.bf16.msra.mxu0 0
    %272 = vmatprep.subr.bf16.mxu0 0
    %273 = vmatpush1.bf16.msra.mxu0 0
    %274 = vmatprep.subr.bf16.mxu0 0
    %275 = vmatpush1.bf16.msra.mxu0 0
    %276 = vmatprep.subr.bf16.mxu0 0
    %277 = vmatpush1.bf16.msra.mxu0 0
    %278 = vmatprep.subr.bf16.mxu0 0
    %279 = vmatpush1.bf16.msra.mxu0 0
    %280 = vmatprep.subr.bf16.mxu0 0
    %281 = vmatpush1.bf16.msra.mxu0 0
    %282 = vmatprep.subr.bf16.mxu0 0
    %283 = vmatpush1.bf16.msra.mxu0 0
    %284 = vmatprep.subr.bf16.mxu0 0
    %285 = vmatpush1.bf16.msra.mxu0 0
    %286 = vmatprep.subr.bf16.mxu0 0
    %287 = vmatpush1.bf16.msra.mxu0 0
    %288 = vmatprep.subr.bf16.mxu0 0
    %289 = vmatpush1.bf16.msra.mxu0 0
    %290 = vmatprep.subr.bf16.mxu0 0
    %291 = vmatpush1.bf16.msra.mxu0 0
    %292 = vmatprep.subr.bf16.mxu0 0
    %293 = vmatpush1.bf16.msra.mxu0 0
    %294 = vmatprep.subr.bf16.mxu0 0
    %295 = vmatpush1.bf16.msra.mxu0 0
    %296 = vmatprep.mubr.bf16.mxu0 0
    %297 = vmatmul.mubr.bf16.gmra.mrb[0].mxu0 %v259
    %v298 = vpop.f32.mrb[0].mxu0
    %v299 = vadd.f32 0.0, %v298
    %v300 = vpop.f32.mrb[0].mxu0
    %v301 = vpop.f32.mrb[0].mxu0
    %v302 = vpop.f32.mrb[0].mxu0
    %303 = vdwg.mxu0
    %v304 = vadd.f32 %v238, %v299
    %v305 = vxor.u32 %v304, 2147483648
    %v306 = vmul.f32 %v305, 1.442695
    %v307 = vpow.pop %v306
    %v308 = vadd.f32 %v307, 1.0
    %v309 = vrcp.pop %v308
    %v310 = vmul.f32 1.0, %v309
    %312 = vrot.lane.b32.xlu0 %v299, 64
    %v313 = vpop.permute.xlu0 %312
    %v315 = vmul.f32 %v310, %v313
    %317 = vrot.lane.b32.xlu0 %v315, 64
    %v318 = vpop.permute.xlu0 %317
    %v320 = vadd.f32 %v238, %v318
    %v321 = vtanh.pop %v320
    %v322 = vsub.f32 1.0, %v310
    %324 = vrot.lane.b32.xlu0 %v321, 96
    %v325 = vpop.permute.xlu0 %324
    %v327 = vmul.f32 %v322, %v325
    %v328 = vmul.f32 %v310, 0.0
    %v329 = vadd.f32 %v327, %v328
    %v330 = vpack.c.bf16 %v329, %v329
    %332 = vrot.lane.b32.xlu0 %v330, 96
    %v333 = vpop.permute.xlu0 %332
    %v335 = vsel %vm239, %v333, 0
    %vm336 = vcmask 523264
    %v337 = vsel %vm336, %v335, 1065369472
    %v347 = vunpack.c.l.b16 %v72
    %v348 = vunpack.c.l.b16 %v73
    %v349 = vunpack.c.l.b16 %v74
    %v350 = vunpack.c.l.b16 %v75
    %v351 = vunpack.c.l.b16 %v76
    %v352 = vunpack.c.l.b16 %v77
    %v353 = vunpack.c.l.b16 %v78
    %v354 = vunpack.c.l.b16 %v79
    %v355 = vunpack.c.l.b16 %v80
    %v356 = vpack.c.b16 %v348, %v347
    %v357 = vpack.c.b16 %v350, %v349
    %v358 = vpack.c.b16 %v352, %v351
    %v359 = vpack.c.b16 %v354, %v353
    %v360 = vpack.c.b16 %v355, %v355
    %v365 = vsel %vm145, %v337, 0
    %v368 = vand.u32 %v360, %v160
    %370 = vmatprep.subr.bf16.mxu0 0
    %371 = vmatpush1.bf16.msra.mxu0 %v356
    %372 = vmatprep.subr.bf16.mxu0 0
    %373 = vmatpush1.bf16.msra.mxu0 %v357
    %374 = vmatprep.subr.bf16.mxu0 0
    %375 = vmatpush1.bf16.msra.mxu0 %v358
    %376 = vmatprep.subr.bf16.mxu0 0
    %377 = vmatpush1.bf16.msra.mxu0 %v359
    %378 = vmatprep.subr.bf16.mxu0 0
    %379 = vmatpush1.bf16.msra.mxu0 %v368
    %380 = vmatprep.subr.bf16.mxu0 0
    %381 = vmatpush1.bf16.msra.mxu0 0
    %382 = vmatprep.subr.bf16.mxu0 0
    %383 = vmatpush1.bf16.msra.mxu0 0
    %384 = vmatprep.subr.bf16.mxu0 0
    %385 = vmatpush1.bf16.msra.mxu0 0
    %386 = vmatprep.subr.bf16.mxu0 0
    %387 = vmatpush1.bf16.msra.mxu0 0
    %388 = vmatprep.subr.bf16.mxu0 0
    %389 = vmatpush1.bf16.msra.mxu0 0
    %390 = vmatprep.subr.bf16.mxu0 0
    %391 = vmatpush1.bf16.msra.mxu0 0
    %392 = vmatprep.subr.bf16.mxu0 0
    %393 = vmatpush1.bf16.msra.mxu0 0
    %394 = vmatprep.subr.bf16.mxu0 0
    %395 = vmatpush1.bf16.msra.mxu0 0
    %396 = vmatprep.subr.bf16.mxu0 0
    %397 = vmatpush1.bf16.msra.mxu0 0
    %398 = vmatprep.subr.bf16.mxu0 0
    %399 = vmatpush1.bf16.msra.mxu0 0
    %400 = vmatprep.subr.bf16.mxu0 0
    %401 = vmatpush1.bf16.msra.mxu0 0
    %402 = vmatprep.mubr.bf16.mxu0 0
    %403 = vmatmul.mubr.bf16.gmra.mrb[0].mxu0 %v365
    %v404 = vpop.f32.mrb[0].mxu0
    %v405 = vadd.f32 0.0, %v404
    %v406 = vpop.f32.mrb[0].mxu0
    %v407 = vpop.f32.mrb[0].mxu0
    %v408 = vpop.f32.mrb[0].mxu0
    %409 = vdwg.mxu0
    %v410 = vxor.u32 %v405, 2147483648
    %v411 = vmul.f32 %v410, 1.442695
    %v412 = vpow.pop %v411
    %v413 = vadd.f32 %v412, 1.0
    %v414 = vrcp.pop %v413
    %v415 = vmul.f32 1.0, %v414
    %417 = vrot.lane.b32.xlu0 %v405, 32
    %v418 = vpop.permute.xlu0 %417
    %v420 = vmul.f32 %v415, %v418
    %422 = vrot.lane.b32.xlu0 %v420, 64
    %v423 = vpop.permute.xlu0 %422
    %v425 = vadd.f32 %v405, %v423
    %v426 = vtanh.pop %v425
    %v427 = vsub.f32 1.0, %v415
    %429 = vrot.lane.b32.xlu0 %v426, 96
    %v430 = vpop.permute.xlu0 %429
    %v432 = vmul.f32 %v427, %v430
    %v433 = vmul.f32 %v415, 0.0
    %v434 = vadd.f32 %v432, %v433
    %436 = vrot.lane.b32.xlu0 %v434, 96
    %v437 = vpop.permute.xlu0 %436
    %439 = vst.msk [vmem:[#allocation3] sm:$0xff] %vm239, %v437
    %s440 = scalar_lea.vmem [#allocation2], 8
    %v441 = vld [vmem:[%s440] sm:$0xff]
    %v442 = vsel %vm239, %v333, 1065369472
    %v443 = vsel %vm258, %v442, 0
    %445 = vmatprep.subr.bf16.mxu0 0
    %446 = vmatpush1.bf16.msra.mxu0 %v253
    %447 = vmatprep.subr.bf16.mxu0 0
    %448 = vmatpush1.bf16.msra.mxu0 %v254
    %449 = vmatprep.subr.bf16.mxu0 0
    %450 = vmatpush1.bf16.msra.mxu0 %v262
    %451 = vmatprep.subr.bf16.mxu0 0
    %452 = vmatpush1.bf16.msra.mxu0 0
    %453 = vmatprep.subr.bf16.mxu0 0
    %454 = vmatpush1.bf16.msra.mxu0 0
    %455 = vmatprep.subr.bf16.mxu0 0
    %456 = vmatpush1.bf16.msra.mxu0 0
    %457 = vmatprep.subr.bf16.mxu0 0
    %458 = vmatpush1.bf16.msra.mxu0 0
    %459 = vmatprep.subr.bf16.mxu0 0
    %460 = vmatpush1.bf16.msra.mxu0 0
    %461 = vmatprep.subr.bf16.mxu0 0
    %462 = vmatpush1.bf16.msra.mxu0 0
    %463 = vmatprep.subr.bf16.mxu0 0
    %464 = vmatpush1.bf16.msra.mxu0 0
    %465 = vmatprep.subr.bf16.mxu0 0
    %466 = vmatpush1.bf16.msra.mxu0 0
    %467 = vmatprep.subr.bf16.mxu0 0
    %468 = vmatpush1.bf16.msra.mxu0 0
    %469 = vmatprep.subr.bf16.mxu0 0
    %470 = vmatpush1.bf16.msra.mxu0 0
    %471 = vmatprep.subr.bf16.mxu0 0
    %472 = vmatpush1.bf16.msra.mxu0 0
    %473 = vmatprep.subr.bf16.mxu0 0
    %474 = vmatpush1.bf16.msra.mxu0 0
    %475 = vmatprep.subr.bf16.mxu0 0
    %476 = vmatpush1.bf16.msra.mxu0 0
    %477 = vmatprep.mubr.bf16.mxu0 0
    %478 = vmatmul.mubr.bf16.gmra.mrb[0].mxu0 %v443
    %v479 = vpop.f32.mrb[0].mxu0
    %v480 = vadd.f32 0.0, %v479
    %v481 = vpop.f32.mrb[0].mxu0
    %v482 = vpop.f32.mrb[0].mxu0
    %v483 = vpop.f32.mrb[0].mxu0
    %484 = vdwg.mxu0
    %v485 = vadd.f32 %v441, %v480
    %v486 = vxor.u32 %v485, 2147483648
    %v487 = vmul.f32 %v486, 1.442695
    %v488 = vpow.pop %v487
    %v489 = vadd.f32 %v488, 1.0
    %v490 = vrcp.pop %v489
    %v491 = vmul.f32 1.0, %v490
    %493 = vrot.lane.b32.xlu0 %v480, 64
    %v494 = vpop.permute.xlu0 %493
    %v496 = vmul.f32 %v491, %v494
    %498 = vrot.lane.b32.xlu0 %v496, 64
    %v499 = vpop.permute.xlu0 %498
    %v501 = vadd.f32 %v441, %v499
    %v502 = vtanh.pop %v501
    %v503 = vsub.f32 1.0, %v491
    %505 = vrot.lane.b32.xlu0 %v502, 96
    %v506 = vpop.permute.xlu0 %505
    %v508 = vmul.f32 %v503, %v506
    %v509 = vmul.f32 %v491, %v329
    %v510 = vadd.f32 %v508, %v509
    %v511 = vpack.c.bf16 %v510, %v510
    %v512 = vpack.c.bf16 %v434, %v434
    %514 = vrot.lane.b32.xlu0 %v511, 96
    %v515 = vpop.permute.xlu0 %514
    %v518 = vsel %vm239, %v515, %v512
    %v519 = vsel %vm336, %v518, 1065369472
    %v520 = vsel %vm145, %v519, 0
    %522 = vmatprep.subr.bf16.mxu0 0
    %523 = vmatpush1.bf16.msra.mxu0 %v356
    %524 = vmatprep.subr.bf16.mxu0 0
    %525 = vmatpush1.bf16.msra.mxu0 %v357
    %526 = vmatprep.subr.bf16.mxu0 0
    %527 = vmatpush1.bf16.msra.mxu0 %v358
    %528 = vmatprep.subr.bf16.mxu0 0
    %529 = vmatpush1.bf16.msra.mxu0 %v359
    %530 = vmatprep.subr.bf16.mxu0 0
    %531 = vmatpush1.bf16.msra.mxu0 %v368
    %532 = vmatprep.subr.bf16.mxu0 0
    %533 = vmatpush1.bf16.msra.mxu0 0
    %534 = vmatprep.subr.bf16.mxu0 0
    %535 = vmatpush1.bf16.msra.mxu0 0
    %536 = vmatprep.subr.bf16.mxu0 0
    %537 = vmatpush1.bf16.msra.mxu0 0
    %538 = vmatprep.subr.bf16.mxu0 0
    %539 = vmatpush1.bf16.msra.mxu0 0
    %540 = vmatprep.subr.bf16.mxu0 0
    %541 = vmatpush1.bf16.msra.mxu0 0
    %542 = vmatprep.subr.bf16.mxu0 0
    %543 = vmatpush1.bf16.msra.mxu0 0
    %544 = vmatprep.subr.bf16.mxu0 0
    %545 = vmatpush1.bf16.msra.mxu0 0
    %546 = vmatprep.subr.bf16.mxu0 0
    %547 = vmatpush1.bf16.msra.mxu0 0
    %548 = vmatprep.subr.bf16.mxu0 0
    %549 = vmatpush1.bf16.msra.mxu0 0
    %550 = vmatprep.subr.bf16.mxu0 0
    %551 = vmatpush1.bf16.msra.mxu0 0
    %552 = vmatprep.subr.bf16.mxu0 0
    %553 = vmatpush1.bf16.msra.mxu0 0
    %554 = vmatprep.mubr.bf16.mxu0 0
    %555 = vmatmul.mubr.bf16.gmra.mrb[0].mxu0 %v520
    %v556 = vpop.f32.mrb[0].mxu0
    %v557 = vadd.f32 0.0, %v556
    %v558 = vpop.f32.mrb[0].mxu0
    %v559 = vpop.f32.mrb[0].mxu0
    %v560 = vpop.f32.mrb[0].mxu0
    %561 = vdwg.mxu0
    %v562 = vxor.u32 %v557, 2147483648
    %v563 = vmul.f32 %v562, 1.442695
    %v564 = vpow.pop %v563
    %v565 = vadd.f32 %v564, 1.0
    %v566 = vrcp.pop %v565
    %v567 = vmul.f32 1.0, %v566
    %569 = vrot.lane.b32.xlu0 %v557, 32
    %v570 = vpop.permute.xlu0 %569
    %v572 = vmul.f32 %v567, %v570
    %574 = vrot.lane.b32.xlu0 %v572, 64
    %v575 = vpop.permute.xlu0 %574
    %v577 = vadd.f32 %v557, %v575
    %v578 = vtanh.pop %v577
    %v579 = vsub.f32 1.0, %v567
    %581 = vrot.lane.b32.xlu0 %v578, 96
    %v582 = vpop.permute.xlu0 %581
    %v584 = vmul.f32 %v579, %v582
    %v585 = vmul.f32 %v567, %v434
    %v586 = vadd.f32 %v584, %v585
    %588 = vrot.lane.b32.xlu0 %v586, 96
    %v589 = vpop.permute.xlu0 %588
    %s591 = scalar_lea.vmem [#allocation3], 8
    %592 = vst.msk [vmem:[%s591] sm:$0xff] %vm239, %v589
    %s593 = scalar_lea.vmem [#allocation2], 16
    %v594 = vld [vmem:[%s593] sm:$0xff]
    %v595 = vsel %vm239, %v515, 1065369472
    %v596 = vsel %vm258, %v595, 0
    %598 = vmatprep.subr.bf16.mxu0 0
    %599 = vmatpush1.bf16.msra.mxu0 %v253
    %600 = vmatprep.subr.bf16.mxu0 0
    %601 = vmatpush1.bf16.msra.mxu0 %v254
    %602 = vmatprep.subr.bf16.mxu0 0
    %603 = vmatpush1.bf16.msra.mxu0 %v262
    %604 = vmatprep.subr.bf16.mxu0 0
    %605 = vmatpush1.bf16.msra.mxu0 0
    %606 = vmatprep.subr.bf16.mxu0 0
    %607 = vmatpush1.bf16.msra.mxu0 0
    %608 = vmatprep.subr.bf16.mxu0 0
    %609 = vmatpush1.bf16.msra.mxu0 0
    %610 = vmatprep.subr.bf16.mxu0 0
    %611 = vmatpush1.bf16.msra.mxu0 0
    %612 = vmatprep.subr.bf16.mxu0 0
    %613 = vmatpush1.bf16.msra.mxu0 0
    %614 = vmatprep.subr.bf16.mxu0 0
    %615 = vmatpush1.bf16.msra.mxu0 0
    %616 = vmatprep.subr.bf16.mxu0 0
    %617 = vmatpush1.bf16.msra.mxu0 0
    %618 = vmatprep.subr.bf16.mxu0 0
    %619 = vmatpush1.bf16.msra.mxu0 0
    %620 = vmatprep.subr.bf16.mxu0 0
    %621 = vmatpush1.bf16.msra.mxu0 0
    %622 = vmatprep.subr.bf16.mxu0 0
    %623 = vmatpush1.bf16.msra.mxu0 0
    %624 = vmatprep.subr.bf16.mxu0 0
    %625 = vmatpush1.bf16.msra.mxu0 0
    %626 = vmatprep.subr.bf16.mxu0 0
    %627 = vmatpush1.bf16.msra.mxu0 0
    %628 = vmatprep.subr.bf16.mxu0 0
    %629 = vmatpush1.bf16.msra.mxu0 0
    %630 = vmatprep.mubr.bf16.mxu0 0
    %631 = vmatmul.mubr.bf16.gmra.mrb[0].mxu0 %v596
    %v632 = vpop.f32.mrb[0].mxu0
    %v633 = vadd.f32 0.0, %v632
    %v634 = vpop.f32.mrb[0].mxu0
    %v635 = vpop.f32.mrb[0].mxu0
    %v636 = vpop.f32.mrb[0].mxu0
    %637 = vdwg.mxu0
    %v638 = vadd.f32 %v594, %v633
    %v639 = vxor.u32 %v638, 2147483648
    %v640 = vmul.f32 %v639, 1.442695
    %v641 = vpow.pop %v640
    %v642 = vadd.f32 %v641, 1.0
    %v643 = vrcp.pop %v642
    %v644 = vmul.f32 1.0, %v643
    %646 = vrot.lane.b32.xlu0 %v633, 64
    %v647 = vpop.permute.xlu0 %646
    %v649 = vmul.f32 %v644, %v647
    %651 = vrot.lane.b32.xlu0 %v649, 64
    %v652 = vpop.permute.xlu0 %651
    %v654 = vadd.f32 %v594, %v652
    %v655 = vtanh.pop %v654
    %v656 = vsub.f32 1.0, %v644
    %658 = vrot.lane.b32.xlu0 %v655, 96
    %v659 = vpop.permute.xlu0 %658
    %v661 = vmul.f32 %v656, %v659
    %v662 = vmul.f32 %v644, %v510
    %v663 = vadd.f32 %v661, %v662
    %v664 = vpack.c.bf16 %v663, %v663
    %v665 = vpack.c.bf16 %v586, %v586
    %667 = vrot.lane.b32.xlu0 %v664, 96
    %v668 = vpop.permute.xlu0 %667
    %v671 = vsel %vm239, %v668, %v665
    %v672 = vsel %vm336, %v671, 1065369472
    %v673 = vsel %vm145, %v672, 0
    %675 = vmatprep.subr.bf16.mxu0 0
    %676 = vmatpush1.bf16.msra.mxu0 %v356
    %677 = vmatprep.subr.bf16.mxu0 0
    %678 = vmatpush1.bf16.msra.mxu0 %v357
    %679 = vmatprep.subr.bf16.mxu0 0
    %680 = vmatpush1.bf16.msra.mxu0 %v358
    %681 = vmatprep.subr.bf16.mxu0 0
    %682 = vmatpush1.bf16.msra.mxu0 %v359
    %683 = vmatprep.subr.bf16.mxu0 0
    %684 = vmatpush1.bf16.msra.mxu0 %v368
    %685 = vmatprep.subr.bf16.mxu0 0
    %686 = vmatpush1.bf16.msra.mxu0 0
    %687 = vmatprep.subr.bf16.mxu0 0
    %688 = vmatpush1.bf16.msra.mxu0 0
    %689 = vmatprep.subr.bf16.mxu0 0
    %690 = vmatpush1.bf16.msra.mxu0 0
    %691 = vmatprep.subr.bf16.mxu0 0
    %692 = vmatpush1.bf16.msra.mxu0 0
    %693 = vmatprep.subr.bf16.mxu0 0
    %694 = vmatpush1.bf16.msra.mxu0 0
    %695 = vmatprep.subr.bf16.mxu0 0
    %696 = vmatpush1.bf16.msra.mxu0 0
    %697 = vmatprep.subr.bf16.mxu0 0
    %698 = vmatpush1.bf16.msra.mxu0 0
    %699 = vmatprep.subr.bf16.mxu0 0
    %700 = vmatpush1.bf16.msra.mxu0 0
    %701 = vmatprep.subr.bf16.mxu0 0
    %702 = vmatpush1.bf16.msra.mxu0 0
    %703 = vmatprep.subr.bf16.mxu0 0
    %704 = vmatpush1.bf16.msra.mxu0 0
    %705 = vmatprep.subr.bf16.mxu0 0
    %706 = vmatpush1.bf16.msra.mxu0 0
    %707 = vmatprep.mubr.bf16.mxu0 0
    %708 = vmatmul.mubr.bf16.gmra.mrb[0].mxu0 %v673
    %v709 = vpop.f32.mrb[0].mxu0
    %v710 = vadd.f32 0.0, %v709
    %v711 = vpop.f32.mrb[0].mxu0
    %v712 = vpop.f32.mrb[0].mxu0
    %v713 = vpop.f32.mrb[0].mxu0
    %714 = vdwg.mxu0
    %v715 = vxor.u32 %v710, 2147483648
    %v716 = vmul.f32 %v715, 1.442695
    %v717 = vpow.pop %v716
    %v718 = vadd.f32 %v717, 1.0
    %v719 = vrcp.pop %v718
    %v720 = vmul.f32 1.0, %v719
    %722 = vrot.lane.b32.xlu0 %v710, 32
    %v723 = vpop.permute.xlu0 %722
    %v725 = vmul.f32 %v720, %v723
    %727 = vrot.lane.b32.xlu0 %v725, 64
    %v728 = vpop.permute.xlu0 %727
    %v730 = vadd.f32 %v710, %v728
    %v731 = vtanh.pop %v730
    %v732 = vsub.f32 1.0, %v720
    %734 = vrot.lane.b32.xlu0 %v731, 96
    %v735 = vpop.permute.xlu0 %734
    %v737 = vmul.f32 %v732, %v735
    %v738 = vmul.f32 %v720, %v586
    %v739 = vadd.f32 %v737, %v738
    %741 = vrot.lane.b32.xlu0 %v739, 96
    %v742 = vpop.permute.xlu0 %741
    %s744 = scalar_lea.vmem [#allocation3], 16
    %745 = vst.msk [vmem:[%s744] sm:$0xff] %vm239, %v742
    %s746 = scalar_lea.vmem [#allocation2], 24
    %v747 = vld [vmem:[%s746] sm:$0xff]
    %v748 = vsel %vm239, %v668, 1065369472
    %v749 = vsel %vm258, %v748, 0
    %751 = vmatprep.subr.bf16.mxu0 0
    %752 = vmatpush1.bf16.msra.mxu0 %v253
    %753 = vmatprep.subr.bf16.mxu0 0
    %754 = vmatpush1.bf16.msra.mxu0 %v254
    %755 = vmatprep.subr.bf16.mxu0 0
    %756 = vmatpush1.bf16.msra.mxu0 %v262
    %757 = vmatprep.subr.bf16.mxu0 0
    %758 = vmatpush1.bf16.msra.mxu0 0
    %759 = vmatprep.subr.bf16.mxu0 0
    %760 = vmatpush1.bf16.msra.mxu0 0
    %761 = vmatprep.subr.bf16.mxu0 0
    %762 = vmatpush1.bf16.msra.mxu0 0
    %763 = vmatprep.subr.bf16.mxu0 0
    %764 = vmatpush1.bf16.msra.mxu0 0
    %765 = vmatprep.subr.bf16.mxu0 0
    %766 = vmatpush1.bf16.msra.mxu0 0
    %767 = vmatprep.subr.bf16.mxu0 0
    %768 = vmatpush1.bf16.msra.mxu0 0
    %769 = vmatprep.subr.bf16.mxu0 0
    %770 = vmatpush1.bf16.msra.mxu0 0
    %771 = vmatprep.subr.bf16.mxu0 0
    %772 = vmatpush1.bf16.msra.mxu0 0
    %773 = vmatprep.subr.bf16.mxu0 0
    %774 = vmatpush1.bf16.msra.mxu0 0
    %775 = vmatprep.subr.bf16.mxu0 0
    %776 = vmatpush1.bf16.msra.mxu0 0
    %777 = vmatprep.subr.bf16.mxu0 0
    %778 = vmatpush1.bf16.msra.mxu0 0
    %779 = vmatprep.subr.bf16.mxu0 0
    %780 = vmatpush1.bf16.msra.mxu0 0
    %781 = vmatprep.subr.bf16.mxu0 0
    %782 = vmatpush1.bf16.msra.mxu0 0
    %783 = vmatprep.mubr.bf16.mxu0 0
    %784 = vmatmul.mubr.bf16.gmra.mrb[0].mxu0 %v749
    %v785 = vpop.f32.mrb[0].mxu0
    %v786 = vadd.f32 0.0, %v785
    %v787 = vpop.f32.mrb[0].mxu0
    %v788 = vpop.f32.mrb[0].mxu0
    %v789 = vpop.f32.mrb[0].mxu0
    %790 = vdwg.mxu0
    %v791 = vadd.f32 %v747, %v786
    %v792 = vxor.u32 %v791, 2147483648
    %v793 = vmul.f32 %v792, 1.442695
    %v794 = vpow.pop %v793
    %v795 = vadd.f32 %v794, 1.0
    %v796 = vrcp.pop %v795
    %v797 = vmul.f32 1.0, %v796
    %799 = vrot.lane.b32.xlu0 %v786, 64
    %v800 = vpop.permute.xlu0 %799
    %v802 = vmul.f32 %v797, %v800
    %804 = vrot.lane.b32.xlu0 %v802, 64
    %v805 = vpop.permute.xlu0 %804
    %v807 = vadd.f32 %v747, %v805
    %v808 = vtanh.pop %v807
    %v809 = vsub.f32 1.0, %v797
    %811 = vrot.lane.b32.xlu0 %v808, 96
    %v812 = vpop.permute.xlu0 %811
    %v814 = vmul.f32 %v809, %v812
    %v815 = vmul.f32 %v797, %v663
    %v816 = vadd.f32 %v814, %v815
    %v817 = vpack.c.bf16 %v816, %v816
    %v818 = vpack.c.bf16 %v739, %v739
    %820 = vrot.lane.b32.xlu0 %v817, 96
    %v821 = vpop.permute.xlu0 %820
    %v824 = vsel %vm239, %v821, %v818
    %v825 = vsel %vm336, %v824, 1065369472
    %v826 = vsel %vm145, %v825, 0
    %828 = vmatprep.subr.bf16.mxu0 0
    %829 = vmatpush1.bf16.msra.mxu0 %v356
    %830 = vmatprep.subr.bf16.mxu0 0
    %831 = vmatpush1.bf16.msra.mxu0 %v357
    %832 = vmatprep.subr.bf16.mxu0 0
    %833 = vmatpush1.bf16.msra.mxu0 %v358
    %834 = vmatprep.subr.bf16.mxu0 0
    %835 = vmatpush1.bf16.msra.mxu0 %v359
    %836 = vmatprep.subr.bf16.mxu0 0
    %837 = vmatpush1.bf16.msra.mxu0 %v368
    %838 = vmatprep.subr.bf16.mxu0 0
    %839 = vmatpush1.bf16.msra.mxu0 0
    %840 = vmatprep.subr.bf16.mxu0 0
    %841 = vmatpush1.bf16.msra.mxu0 0
    %842 = vmatprep.subr.bf16.mxu0 0
    %843 = vmatpush1.bf16.msra.mxu0 0
    %844 = vmatprep.subr.bf16.mxu0 0
    %845 = vmatpush1.bf16.msra.mxu0 0
    %846 = vmatprep.subr.bf16.mxu0 0
    %847 = vmatpush1.bf16.msra.mxu0 0
    %848 = vmatprep.subr.bf16.mxu0 0
    %849 = vmatpush1.bf16.msra.mxu0 0
    %850 = vmatprep.subr.bf16.mxu0 0
    %851 = vmatpush1.bf16.msra.mxu0 0
    %852 = vmatprep.subr.bf16.mxu0 0
    %853 = vmatpush1.bf16.msra.mxu0 0
    %854 = vmatprep.subr.bf16.mxu0 0
    %855 = vmatpush1.bf16.msra.mxu0 0
    %856 = vmatprep.subr.bf16.mxu0 0
    %857 = vmatpush1.bf16.msra.mxu0 0
    %858 = vmatprep.subr.bf16.mxu0 0
    %859 = vmatpush1.bf16.msra.mxu0 0
    %860 = vmatprep.mubr.bf16.mxu0 0
    %861 = vmatmul.mubr.bf16.gmra.mrb[0].mxu0 %v826
    %v862 = vpop.f32.mrb[0].mxu0
    %v863 = vadd.f32 0.0, %v862
    %v864 = vpop.f32.mrb[0].mxu0
    %v865 = vpop.f32.mrb[0].mxu0
    %v866 = vpop.f32.mrb[0].mxu0
    %867 = vdwg.mxu0
    %v868 = vxor.u32 %v863, 2147483648
    %v869 = vmul.f32 %v868, 1.442695
    %v870 = vpow.pop %v869
    %v871 = vadd.f32 %v870, 1.0
    %v872 = vrcp.pop %v871
    %v873 = vmul.f32 1.0, %v872
    %875 = vrot.lane.b32.xlu0 %v863, 32
    %v876 = vpop.permute.xlu0 %875
    %v878 = vmul.f32 %v873, %v876
    %880 = vrot.lane.b32.xlu0 %v878, 64
    %v881 = vpop.permute.xlu0 %880
    %v883 = vadd.f32 %v863, %v881
    %v884 = vtanh.pop %v883
    %v885 = vsub.f32 1.0, %v873
    %887 = vrot.lane.b32.xlu0 %v884, 96
    %v888 = vpop.permute.xlu0 %887
    %v890 = vmul.f32 %v885, %v888
    %v891 = vmul.f32 %v873, %v739
    %v892 = vadd.f32 %v890, %v891
    %894 = vrot.lane.b32.xlu0 %v892, 96
    %v895 = vpop.permute.xlu0 %894
    %s897 = scalar_lea.vmem [#allocation3], 24
    %898 = vst.msk [vmem:[%s897] sm:$0xff] %vm239, %v895
    %s899 = scalar_lea.vmem [#allocation2], 32
    %v900 = vld [vmem:[%s899] sm:$0xff]
    %v901 = vsel %vm239, %v821, 1065369472
    %v902 = vsel %vm258, %v901, 0
    %904 = vmatprep.subr.bf16.mxu0 0
    %905 = vmatpush1.bf16.msra.mxu0 %v253
    %906 = vmatprep.subr.bf16.mxu0 0
    %907 = vmatpush1.bf16.msra.mxu0 %v254
    %908 = vmatprep.subr.bf16.mxu0 0
    %909 = vmatpush1.bf16.msra.mxu0 %v262
    %910 = vmatprep.subr.bf16.mxu0 0
    %911 = vmatpush1.bf16.msra.mxu0 0
    %912 = vmatprep.subr.bf16.mxu0 0
    %913 = vmatpush1.bf16.msra.mxu0 0
    %914 = vmatprep.subr.bf16.mxu0 0
    %915 = vmatpush1.bf16.msra.mxu0 0
    %916 = vmatprep.subr.bf16.mxu0 0
    %917 = vmatpush1.bf16.msra.mxu0 0
    %918 = vmatprep.subr.bf16.mxu0 0
    %919 = vmatpush1.bf16.msra.mxu0 0
    %920 = vmatprep.subr.bf16.mxu0 0
    %921 = vmatpush1.bf16.msra.mxu0 0
    %922 = vmatprep.subr.bf16.mxu0 0
    %923 = vmatpush1.bf16.msra.mxu0 0
    %924 = vmatprep.subr.bf16.mxu0 0
    %925 = vmatpush1.bf16.msra.mxu0 0
    %926 = vmatprep.subr.bf16.mxu0 0
    %927 = vmatpush1.bf16.msra.mxu0 0
    %928 = vmatprep.subr.bf16.mxu0 0
    %929 = vmatpush1.bf16.msra.mxu0 0
    %930 = vmatprep.subr.bf16.mxu0 0
    %931 = vmatpush1.bf16.msra.mxu0 0
    %932 = vmatprep.subr.bf16.mxu0 0
    %933 = vmatpush1.bf16.msra.mxu0 0
    %934 = vmatprep.subr.bf16.mxu0 0
    %935 = vmatpush1.bf16.msra.mxu0 0
    %936 = vmatprep.mubr.bf16.mxu0 0
    %937 = vmatmul.mubr.bf16.gmra.mrb[0].mxu0 %v902
    %v938 = vpop.f32.mrb[0].mxu0
    %v939 = vadd.f32 0.0, %v938
    %v940 = vpop.f32.mrb[0].mxu0
    %v941 = vpop.f32.mrb[0].mxu0
    %v942 = vpop.f32.mrb[0].mxu0
    %943 = vdwg.mxu0
    %v944 = vadd.f32 %v900, %v939
    %v945 = vxor.u32 %v944, 2147483648
    %v946 = vmul.f32 %v945, 1.442695
    %v947 = vpow.pop %v946
    %v948 = vadd.f32 %v947, 1.0
    %v949 = vrcp.pop %v948
    %v950 = vmul.f32 1.0, %v949
    %952 = vrot.lane.b32.xlu0 %v939, 64
    %v953 = vpop.permute.xlu0 %952
    %v955 = vmul.f32 %v950, %v953
    %957 = vrot.lane.b32.xlu0 %v955, 64
    %v958 = vpop.permute.xlu0 %957
    %v960 = vadd.f32 %v900, %v958
    %v961 = vtanh.pop %v960
    %v962 = vsub.f32 1.0, %v950
    %964 = vrot.lane.b32.xlu0 %v961, 96
    %v965 = vpop.permute.xlu0 %964
    %v967 = vmul.f32 %v962, %v965
    %v968 = vmul.f32 %v950, %v816
    %v969 = vadd.f32 %v967, %v968
    %v970 = vpack.c.bf16 %v969, %v969
    %v971 = vpack.c.bf16 %v892, %v892
    %973 = vrot.lane.b32.xlu0 %v970, 96
    %v974 = vpop.permute.xlu0 %973
    %v977 = vsel %vm239, %v974, %v971
    %v978 = vsel %vm336, %v977, 1065369472
    %v979 = vsel %vm145, %v978, 0
    %981 = vmatprep.subr.bf16.mxu0 0
    %982 = vmatpush1.bf16.msra.mxu0 %v356
    %983 = vmatprep.subr.bf16.mxu0 0
    %984 = vmatpush1.bf16.msra.mxu0 %v357
    %985 = vmatprep.subr.bf16.mxu0 0
    %986 = vmatpush1.bf16.msra.mxu0 %v358
    %987 = vmatprep.subr.bf16.mxu0 0
    %988 = vmatpush1.bf16.msra.mxu0 %v359
    %989 = vmatprep.subr.bf16.mxu0 0
    %990 = vmatpush1.bf16.msra.mxu0 %v368
    %991 = vmatprep.subr.bf16.mxu0 0
    %992 = vmatpush1.bf16.msra.mxu0 0
    %993 = vmatprep.subr.bf16.mxu0 0
    %994 = vmatpush1.bf16.msra.mxu0 0
    %995 = vmatprep.subr.bf16.mxu0 0
    %996 = vmatpush1.bf16.msra.mxu0 0
    %997 = vmatprep.subr.bf16.mxu0 0
    %998 = vmatpush1.bf16.msra.mxu0 0
    %999 = vmatprep.subr.bf16.mxu0 0
    %1000 = vmatpush1.bf16.msra.mxu0 0
    %1001 = vmatprep.subr.bf16.mxu0 0
    %1002 = vmatpush1.bf16.msra.mxu0 0
    %1003 = vmatprep.subr.bf16.mxu0 0
    %1004 = vmatpush1.bf16.msra.mxu0 0
    %1005 = vmatprep.subr.bf16.mxu0 0
    %1006 = vmatpush1.bf16.msra.mxu0 0
    %1007 = vmatprep.subr.bf16.mxu0 0
    %1008 = vmatpush1.bf16.msra.mxu0 0
    %1009 = vmatprep.subr.bf16.mxu0 0
    %1010 = vmatpush1.bf16.msra.mxu0 0
    %1011 = vmatprep.subr.bf16.mxu0 0
    %1012 = vmatpush1.bf16.msra.mxu0 0
    %1013 = vmatprep.mubr.bf16.mxu0 0
    %1014 = vmatmul.mubr.bf16.gmra.mrb[0].mxu0 %v979
    %v1015 = vpop.f32.mrb[0].mxu0
    %v1016 = vadd.f32 0.0, %v1015
    %v1017 = vpop.f32.mrb[0].mxu0
    %v1018 = vpop.f32.mrb[0].mxu0
    %v1019 = vpop.f32.mrb[0].mxu0
    %1020 = vdwg.mxu0
    %v1021 = vxor.u32 %v1016, 2147483648
    %v1022 = vmul.f32 %v1021, 1.442695
    %v1023 = vpow.pop %v1022
    %v1024 = vadd.f32 %v1023, 1.0
    %v1025 = vrcp.pop %v1024
    %v1026 = vmul.f32 1.0, %v1025
    %1028 = vrot.lane.b32.xlu0 %v1016, 32
    %v1029 = vpop.permute.xlu0 %1028
    %v1031 = vmul.f32 %v1026, %v1029
    %1033 = vrot.lane.b32.xlu0 %v1031, 64
    %v1034 = vpop.permute.xlu0 %1033
    %v1036 = vadd.f32 %v1016, %v1034
    %v1037 = vtanh.pop %v1036
    %v1038 = vsub.f32 1.0, %v1026
    %1040 = vrot.lane.b32.xlu0 %v1037, 96
    %v1041 = vpop.permute.xlu0 %1040
    %v1043 = vmul.f32 %v1038, %v1041
    %v1044 = vmul.f32 %v1026, %v892
    %v1045 = vadd.f32 %v1043, %v1044
    %1047 = vrot.lane.b32.xlu0 %v1045, 96
    %v1048 = vpop.permute.xlu0 %1047
    %s1050 = scalar_lea.vmem [#allocation3], 32
    %1051 = vst.msk [vmem:[%s1050] sm:$0xff] %vm239, %v1048
    %s1052 = scalar_lea.vmem [#allocation2], 40
    %v1053 = vld [vmem:[%s1052] sm:$0xff]
    %v1054 = vsel %vm239, %v974, 1065369472
    %v1055 = vsel %vm258, %v1054, 0
    %1057 = vmatprep.subr.bf16.mxu0 0
    %1058 = vmatpush1.bf16.msra.mxu0 %v253
    %1059 = vmatprep.subr.bf16.mxu0 0
    %1060 = vmatpush1.bf16.msra.mxu0 %v254
    %1061 = vmatprep.subr.bf16.mxu0 0
    %1062 = vmatpush1.bf16.msra.mxu0 %v262
    %1063 = vmatprep.subr.bf16.mxu0 0
    %1064 = vmatpush1.bf16.msra.mxu0 0
    %1065 = vmatprep.subr.bf16.mxu0 0
    %1066 = vmatpush1.bf16.msra.mxu0 0
    %1067 = vmatprep.subr.bf16.mxu0 0
    %1068 = vmatpush1.bf16.msra.mxu0 0
    %1069 = vmatprep.subr.bf16.mxu0 0
    %1070 = vmatpush1.bf16.msra.mxu0 0
    %1071 = vmatprep.subr.bf16.mxu0 0
    %1072 = vmatpush1.bf16.msra.mxu0 0
    %1073 = vmatprep.subr.bf16.mxu0 0
    %1074 = vmatpush1.bf16.msra.mxu0 0
    %1075 = vmatprep.subr.bf16.mxu0 0
    %1076 = vmatpush1.bf16.msra.mxu0 0
    %1077 = vmatprep.subr.bf16.mxu0 0
    %1078 = vmatpush1.bf16.msra.mxu0 0
    %1079 = vmatprep.subr.bf16.mxu0 0
    %1080 = vmatpush1.bf16.msra.mxu0 0
    %1081 = vmatprep.subr.bf16.mxu0 0
    %1082 = vmatpush1.bf16.msra.mxu0 0
    %1083 = vmatprep.subr.bf16.mxu0 0
    %1084 = vmatpush1.bf16.msra.mxu0 0
    %1085 = vmatprep.subr.bf16.mxu0 0
    %1086 = vmatpush1.bf16.msra.mxu0 0
    %1087 = vmatprep.subr.bf16.mxu0 0
    %1088 = vmatpush1.bf16.msra.mxu0 0
    %1089 = vmatprep.mubr.bf16.mxu0 0
    %1090 = vmatmul.mubr.bf16.gmra.mrb[0].mxu0 %v1055
    %v1091 = vpop.f32.mrb[0].mxu0
    %v1092 = vadd.f32 0.0, %v1091
    %v1093 = vpop.f32.mrb[0].mxu0
    %v1094 = vpop.f32.mrb[0].mxu0
    %v1095 = vpop.f32.mrb[0].mxu0
    %1096 = vdwg.mxu0
    %v1097 = vadd.f32 %v1053, %v1092
    %v1098 = vxor.u32 %v1097, 2147483648
    %v1099 = vmul.f32 %v1098, 1.442695
    %v1100 = vpow.pop %v1099
    %v1101 = vadd.f32 %v1100, 1.0
    %v1102 = vrcp.pop %v1101
    %v1103 = vmul.f32 1.0, %v1102
    %1105 = vrot.lane.b32.xlu0 %v1092, 64
    %v1106 = vpop.permute.xlu0 %1105
    %v1108 = vmul.f32 %v1103, %v1106
    %1110 = vrot.lane.b32.xlu0 %v1108, 64
    %v1111 = vpop.permute.xlu0 %1110
    %v1113 = vadd.f32 %v1053, %v1111
    %v1114 = vtanh.pop %v1113
    %v1115 = vsub.f32 1.0, %v1103
    %1117 = vrot.lane.b32.xlu0 %v1114, 96
    %v1118 = vpop.permute.xlu0 %1117
    %v1120 = vmul.f32 %v1115, %v1118
    %v1121 = vmul.f32 %v1103, %v969
    %v1122 = vadd.f32 %v1120, %v1121
    %v1123 = vpack.c.bf16 %v1122, %v1122
    %v1124 = vpack.c.bf16 %v1045, %v1045
    %1126 = vrot.lane.b32.xlu0 %v1123, 96
    %v1127 = vpop.permute.xlu0 %1126
    %v1130 = vsel %vm239, %v1127, %v1124
    %v1131 = vsel %vm336, %v1130, 1065369472
    %v1132 = vsel %vm145, %v1131, 0
    %1134 = vmatprep.subr.bf16.mxu0 0
    %1135 = vmatpush1.bf16.msra.mxu0 %v356
    %1136 = vmatprep.subr.bf16.mxu0 0
    %1137 = vmatpush1.bf16.msra.mxu0 %v357
    %1138 = vmatprep.subr.bf16.mxu0 0
    %1139 = vmatpush1.bf16.msra.mxu0 %v358
    %1140 = vmatprep.subr.bf16.mxu0 0
    %1141 = vmatpush1.bf16.msra.mxu0 %v359
    %1142 = vmatprep.subr.bf16.mxu0 0
    %1143 = vmatpush1.bf16.msra.mxu0 %v368
    %1144 = vmatprep.subr.bf16.mxu0 0
    %1145 = vmatpush1.bf16.msra.mxu0 0
    %1146 = vmatprep.subr.bf16.mxu0 0
    %1147 = vmatpush1.bf16.msra.mxu0 0
    %1148 = vmatprep.subr.bf16.mxu0 0
    %1149 = vmatpush1.bf16.msra.mxu0 0
    %1150 = vmatprep.subr.bf16.mxu0 0
    %1151 = vmatpush1.bf16.msra.mxu0 0
    %1152 = vmatprep.subr.bf16.mxu0 0
    %1153 = vmatpush1.bf16.msra.mxu0 0
    %1154 = vmatprep.subr.bf16.mxu0 0
    %1155 = vmatpush1.bf16.msra.mxu0 0
    %1156 = vmatprep.subr.bf16.mxu0 0
    %1157 = vmatpush1.bf16.msra.mxu0 0
    %1158 = vmatprep.subr.bf16.mxu0 0
    %1159 = vmatpush1.bf16.msra.mxu0 0
    %1160 = vmatprep.subr.bf16.mxu0 0
    %1161 = vmatpush1.bf16.msra.mxu0 0
    %1162 = vmatprep.subr.bf16.mxu0 0
    %1163 = vmatpush1.bf16.msra.mxu0 0
    %1164 = vmatprep.subr.bf16.mxu0 0
    %1165 = vmatpush1.bf16.msra.mxu0 0
    %1166 = vmatprep.mubr.bf16.mxu0 0
    %1167 = vmatmul.mubr.bf16.gmra.mrb[0].mxu0 %v1132
    %v1168 = vpop.f32.mrb[0].mxu0
    %v1169 = vadd.f32 0.0, %v1168
    %v1170 = vpop.f32.mrb[0].mxu0
    %v1171 = vpop.f32.mrb[0].mxu0
    %v1172 = vpop.f32.mrb[0].mxu0
    %1173 = vdwg.mxu0
    %v1174 = vxor.u32 %v1169, 2147483648
    %v1175 = vmul.f32 %v1174, 1.442695
    %v1176 = vpow.pop %v1175
    %v1177 = vadd.f32 %v1176, 1.0
    %v1178 = vrcp.pop %v1177
    %v1179 = vmul.f32 1.0, %v1178
    %1181 = vrot.lane.b32.xlu0 %v1169, 32
    %v1182 = vpop.permute.xlu0 %1181
    %v1184 = vmul.f32 %v1179, %v1182
    %1186 = vrot.lane.b32.xlu0 %v1184, 64
    %v1187 = vpop.permute.xlu0 %1186
    %v1189 = vadd.f32 %v1169, %v1187
    %v1190 = vtanh.pop %v1189
    %v1191 = vsub.f32 1.0, %v1179
    %1193 = vrot.lane.b32.xlu0 %v1190, 96
    %v1194 = vpop.permute.xlu0 %1193
    %v1196 = vmul.f32 %v1191, %v1194
    %v1197 = vmul.f32 %v1179, %v1045
    %v1198 = vadd.f32 %v1196, %v1197
    %1200 = vrot.lane.b32.xlu0 %v1198, 96
    %v1201 = vpop.permute.xlu0 %1200
    %s1203 = scalar_lea.vmem [#allocation3], 40
    %1204 = vst.msk [vmem:[%s1203] sm:$0xff] %vm239, %v1201
    %s1205 = scalar_lea.vmem [#allocation2], 48
    %v1206 = vld [vmem:[%s1205] sm:$0xff]
    %v1207 = vsel %vm239, %v1127, 1065369472
    %v1208 = vsel %vm258, %v1207, 0
    %1210 = vmatprep.subr.bf16.mxu0 0
    %1211 = vmatpush1.bf16.msra.mxu0 %v253
    %1212 = vmatprep.subr.bf16.mxu0 0
    %1213 = vmatpush1.bf16.msra.mxu0 %v254
    %1214 = vmatprep.subr.bf16.mxu0 0
    %1215 = vmatpush1.bf16.msra.mxu0 %v262
    %1216 = vmatprep.subr.bf16.mxu0 0
    %1217 = vmatpush1.bf16.msra.mxu0 0
    %1218 = vmatprep.subr.bf16.mxu0 0
    %1219 = vmatpush1.bf16.msra.mxu0 0
    %1220 = vmatprep.subr.bf16.mxu0 0
    %1221 = vmatpush1.bf16.msra.mxu0 0
    %1222 = vmatprep.subr.bf16.mxu0 0
    %1223 = vmatpush1.bf16.msra.mxu0 0
    %1224 = vmatprep.subr.bf16.mxu0 0
    %1225 = vmatpush1.bf16.msra.mxu0 0
    %1226 = vmatprep.subr.bf16.mxu0 0
    %1227 = vmatpush1.bf16.msra.mxu0 0
    %1228 = vmatprep.subr.bf16.mxu0 0
    %1229 = vmatpush1.bf16.msra.mxu0 0
    %1230 = vmatprep.subr.bf16.mxu0 0
    %1231 = vmatpush1.bf16.msra.mxu0 0
    %1232 = vmatprep.subr.bf16.mxu0 0
    %1233 = vmatpush1.bf16.msra.mxu0 0
    %1234 = vmatprep.subr.bf16.mxu0 0
    %1235 = vmatpush1.bf16.msra.mxu0 0
    %1236 = vmatprep.subr.bf16.mxu0 0
    %1237 = vmatpush1.bf16.msra.mxu0 0
    %1238 = vmatprep.subr.bf16.mxu0 0
    %1239 = vmatpush1.bf16.msra.mxu0 0
    %1240 = vmatprep.subr.bf16.mxu0 0
    %1241 = vmatpush1.bf16.msra.mxu0 0
    %1242 = vmatprep.mubr.bf16.mxu0 0
    %1243 = vmatmul.mubr.bf16.gmra.mrb[0].mxu0 %v1208
    %v1244 = vpop.f32.mrb[0].mxu0
    %v1245 = vadd.f32 0.0, %v1244
    %v1246 = vpop.f32.mrb[0].mxu0
    %v1247 = vpop.f32.mrb[0].mxu0
    %v1248 = vpop.f32.mrb[0].mxu0
    %1249 = vdwg.mxu0
    %v1250 = vadd.f32 %v1206, %v1245
    %v1251 = vxor.u32 %v1250, 2147483648
    %v1252 = vmul.f32 %v1251, 1.442695
    %v1253 = vpow.pop %v1252
    %v1254 = vadd.f32 %v1253, 1.0
    %v1255 = vrcp.pop %v1254
    %v1256 = vmul.f32 1.0, %v1255
    %1258 = vrot.lane.b32.xlu0 %v1245, 64
    %v1259 = vpop.permute.xlu0 %1258
    %v1261 = vmul.f32 %v1256, %v1259
    %1263 = vrot.lane.b32.xlu0 %v1261, 64
    %v1264 = vpop.permute.xlu0 %1263
    %v1266 = vadd.f32 %v1206, %v1264
    %v1267 = vtanh.pop %v1266
    %v1268 = vsub.f32 1.0, %v1256
    %1270 = vrot.lane.b32.xlu0 %v1267, 96
    %v1271 = vpop.permute.xlu0 %1270
    %v1273 = vmul.f32 %v1268, %v1271
    %v1274 = vmul.f32 %v1256, %v1122
    %v1275 = vadd.f32 %v1273, %v1274
    %v1276 = vpack.c.bf16 %v1275, %v1275
    %v1277 = vpack.c.bf16 %v1198, %v1198
    %1279 = vrot.lane.b32.xlu0 %v1276, 96
    %v1280 = vpop.permute.xlu0 %1279
    %v1283 = vsel %vm239, %v1280, %v1277
    %v1284 = vsel %vm336, %v1283, 1065369472
    %v1285 = vsel %vm145, %v1284, 0
    %1287 = vmatprep.subr.bf16.mxu0 0
    %1288 = vmatpush1.bf16.msra.mxu0 %v356
    %1289 = vmatprep.subr.bf16.mxu0 0
    %1290 = vmatpush1.bf16.msra.mxu0 %v357
    %1291 = vmatprep.subr.bf16.mxu0 0
    %1292 = vmatpush1.bf16.msra.mxu0 %v358
    %1293 = vmatprep.subr.bf16.mxu0 0
    %1294 = vmatpush1.bf16.msra.mxu0 %v359
    %1295 = vmatprep.subr.bf16.mxu0 0
    %1296 = vmatpush1.bf16.msra.mxu0 %v368
    %1297 = vmatprep.subr.bf16.mxu0 0
    %1298 = vmatpush1.bf16.msra.mxu0 0
    %1299 = vmatprep.subr.bf16.mxu0 0
    %1300 = vmatpush1.bf16.msra.mxu0 0
    %1301 = vmatprep.subr.bf16.mxu0 0
    %1302 = vmatpush1.bf16.msra.mxu0 0
    %1303 = vmatprep.subr.bf16.mxu0 0
    %1304 = vmatpush1.bf16.msra.mxu0 0
    %1305 = vmatprep.subr.bf16.mxu0 0
    %1306 = vmatpush1.bf16.msra.mxu0 0
    %1307 = vmatprep.subr.bf16.mxu0 0
    %1308 = vmatpush1.bf16.msra.mxu0 0
    %1309 = vmatprep.subr.bf16.mxu0 0
    %1310 = vmatpush1.bf16.msra.mxu0 0
    %1311 = vmatprep.subr.bf16.mxu0 0
    %1312 = vmatpush1.bf16.msra.mxu0 0
    %1313 = vmatprep.subr.bf16.mxu0 0
    %1314 = vmatpush1.bf16.msra.mxu0 0
    %1315 = vmatprep.subr.bf16.mxu0 0
    %1316 = vmatpush1.bf16.msra.mxu0 0
    %1317 = vmatprep.subr.bf16.mxu0 0
    %1318 = vmatpush1.bf16.msra.mxu0 0
    %1319 = vmatprep.mubr.bf16.mxu0 0
    %1320 = vmatmul.mubr.bf16.gmra.mrb[0].mxu0 %v1285
    %v1321 = vpop.f32.mrb[0].mxu0
    %v1322 = vadd.f32 0.0, %v1321
    %v1323 = vpop.f32.mrb[0].mxu0
    %v1324 = vpop.f32.mrb[0].mxu0
    %v1325 = vpop.f32.mrb[0].mxu0
    %1326 = vdwg.mxu0
    %v1327 = vxor.u32 %v1322, 2147483648
    %v1328 = vmul.f32 %v1327, 1.442695
    %v1329 = vpow.pop %v1328
    %v1330 = vadd.f32 %v1329, 1.0
    %v1331 = vrcp.pop %v1330
    %v1332 = vmul.f32 1.0, %v1331
    %1334 = vrot.lane.b32.xlu0 %v1322, 32
    %v1335 = vpop.permute.xlu0 %1334
    %v1337 = vmul.f32 %v1332, %v1335
    %1339 = vrot.lane.b32.xlu0 %v1337, 64
    %v1340 = vpop.permute.xlu0 %1339
    %v1342 = vadd.f32 %v1322, %v1340
    %v1343 = vtanh.pop %v1342
    %v1344 = vsub.f32 1.0, %v1332
    %1346 = vrot.lane.b32.xlu0 %v1343, 96
    %v1347 = vpop.permute.xlu0 %1346
    %v1349 = vmul.f32 %v1344, %v1347
    %v1350 = vmul.f32 %v1332, %v1198
    %v1351 = vadd.f32 %v1349, %v1350
    %1353 = vrot.lane.b32.xlu0 %v1351, 96
    %v1354 = vpop.permute.xlu0 %1353
    %s1356 = scalar_lea.vmem [#allocation3], 48
    %1357 = vst.msk [vmem:[%s1356] sm:$0xff] %vm239, %v1354
    %s1358 = scalar_lea.vmem [#allocation2], 56
    %v1359 = vld [vmem:[%s1358] sm:$0xff]
    %v1360 = vsel %vm239, %v1280, 1065369472
    %v1361 = vsel %vm258, %v1360, 0
    %1363 = vmatprep.subr.bf16.mxu0 0
    %1364 = vmatpush1.bf16.msra.mxu0 %v253
    %1365 = vmatprep.subr.bf16.mxu0 0
    %1366 = vmatpush1.bf16.msra.mxu0 %v254
    %1367 = vmatprep.subr.bf16.mxu0 0
    %1368 = vmatpush1.bf16.msra.mxu0 %v262
    %1369 = vmatprep.subr.bf16.mxu0 0
    %1370 = vmatpush1.bf16.msra.mxu0 0
    %1371 = vmatprep.subr.bf16.mxu0 0
    %1372 = vmatpush1.bf16.msra.mxu0 0
    %1373 = vmatprep.subr.bf16.mxu0 0
    %1374 = vmatpush1.bf16.msra.mxu0 0
    %1375 = vmatprep.subr.bf16.mxu0 0
    %1376 = vmatpush1.bf16.msra.mxu0 0
    %1377 = vmatprep.subr.bf16.mxu0 0
    %1378 = vmatpush1.bf16.msra.mxu0 0
    %1379 = vmatprep.subr.bf16.mxu0 0
    %1380 = vmatpush1.bf16.msra.mxu0 0
    %1381 = vmatprep.subr.bf16.mxu0 0
    %1382 = vmatpush1.bf16.msra.mxu0 0
    %1383 = vmatprep.subr.bf16.mxu0 0
    %1384 = vmatpush1.bf16.msra.mxu0 0
    %1385 = vmatprep.subr.bf16.mxu0 0
    %1386 = vmatpush1.bf16.msra.mxu0 0
    %1387 = vmatprep.subr.bf16.mxu0 0
    %1388 = vmatpush1.bf16.msra.mxu0 0
    %1389 = vmatprep.subr.bf16.mxu0 0
    %1390 = vmatpush1.bf16.msra.mxu0 0
    %1391 = vmatprep.subr.bf16.mxu0 0
    %1392 = vmatpush1.bf16.msra.mxu0 0
    %1393 = vmatprep.subr.bf16.mxu0 0
    %1394 = vmatpush1.bf16.msra.mxu0 0
    %1395 = vmatprep.mubr.bf16.mxu0 0
    %1396 = vmatmul.mubr.bf16.gmra.mrb[0].mxu0 %v1361
    %v1397 = vpop.f32.mrb[0].mxu0
    %v1398 = vadd.f32 0.0, %v1397
    %v1399 = vpop.f32.mrb[0].mxu0
    %v1400 = vpop.f32.mrb[0].mxu0
    %v1401 = vpop.f32.mrb[0].mxu0
    %1402 = vdwg.mxu0
    %v1403 = vadd.f32 %v1359, %v1398
    %v1404 = vxor.u32 %v1403, 2147483648
    %v1405 = vmul.f32 %v1404, 1.442695
    %v1406 = vpow.pop %v1405
    %v1407 = vadd.f32 %v1406, 1.0
    %v1408 = vrcp.pop %v1407
    %v1409 = vmul.f32 1.0, %v1408
    %1411 = vrot.lane.b32.xlu0 %v1398, 64
    %v1412 = vpop.permute.xlu0 %1411
    %v1414 = vmul.f32 %v1409, %v1412
    %1416 = vrot.lane.b32.xlu0 %v1414, 64
    %v1417 = vpop.permute.xlu0 %1416
    %v1419 = vadd.f32 %v1359, %v1417
    %v1420 = vtanh.pop %v1419
    %v1421 = vsub.f32 1.0, %v1409
    %1423 = vrot.lane.b32.xlu0 %v1420, 96
    %v1424 = vpop.permute.xlu0 %1423
    %v1426 = vmul.f32 %v1421, %v1424
    %v1427 = vmul.f32 %v1409, %v1275
    %v1428 = vadd.f32 %v1426, %v1427
    %v1429 = vpack.c.bf16 %v1428, %v1428
    %v1430 = vpack.c.bf16 %v1351, %v1351
    %1432 = vrot.lane.b32.xlu0 %v1429, 96
    %v1433 = vpop.permute.xlu0 %1432
    %v1436 = vsel %vm239, %v1433, %v1430
    %v1437 = vsel %vm336, %v1436, 1065369472
    %v1438 = vsel %vm145, %v1437, 0
    %1440 = vmatprep.subr.bf16.mxu0 0
    %1441 = vmatpush1.bf16.msra.mxu0 %v356
    %1442 = vmatprep.subr.bf16.mxu0 0
    %1443 = vmatpush1.bf16.msra.mxu0 %v357
    %1444 = vmatprep.subr.bf16.mxu0 0
    %1445 = vmatpush1.bf16.msra.mxu0 %v358
    %1446 = vmatprep.subr.bf16.mxu0 0
    %1447 = vmatpush1.bf16.msra.mxu0 %v359
    %1448 = vmatprep.subr.bf16.mxu0 0
    %1449 = vmatpush1.bf16.msra.mxu0 %v368
    %1450 = vmatprep.subr.bf16.mxu0 0
    %1451 = vmatpush1.bf16.msra.mxu0 0
    %1452 = vmatprep.subr.bf16.mxu0 0
    %1453 = vmatpush1.bf16.msra.mxu0 0
    %1454 = vmatprep.subr.bf16.mxu0 0
    %1455 = vmatpush1.bf16.msra.mxu0 0
    %1456 = vmatprep.subr.bf16.mxu0 0
    %1457 = vmatpush1.bf16.msra.mxu0 0
    %1458 = vmatprep.subr.bf16.mxu0 0
    %1459 = vmatpush1.bf16.msra.mxu0 0
    %1460 = vmatprep.subr.bf16.mxu0 0
    %1461 = vmatpush1.bf16.msra.mxu0 0
    %1462 = vmatprep.subr.bf16.mxu0 0
    %1463 = vmatpush1.bf16.msra.mxu0 0
    %1464 = vmatprep.subr.bf16.mxu0 0
    %1465 = vmatpush1.bf16.msra.mxu0 0
    %1466 = vmatprep.subr.bf16.mxu0 0
    %1467 = vmatpush1.bf16.msra.mxu0 0
    %1468 = vmatprep.subr.bf16.mxu0 0
    %1469 = vmatpush1.bf16.msra.mxu0 0
    %1470 = vmatprep.subr.bf16.mxu0 0
    %1471 = vmatpush1.bf16.msra.mxu0 0
    %1472 = vmatprep.mubr.bf16.mxu0 0
    %1473 = vmatmul.mubr.bf16.gmra.mrb[0].mxu0 %v1438
    %v1474 = vpop.f32.mrb[0].mxu0
    %v1475 = vadd.f32 0.0, %v1474
    %v1476 = vpop.f32.mrb[0].mxu0
    %v1477 = vpop.f32.mrb[0].mxu0
    %v1478 = vpop.f32.mrb[0].mxu0
    %1479 = vdwg.mxu0
    %v1480 = vxor.u32 %v1475, 2147483648
    %v1481 = vmul.f32 %v1480, 1.442695
    %v1482 = vpow.pop %v1481
    %v1483 = vadd.f32 %v1482, 1.0
    %v1484 = vrcp.pop %v1483
    %v1485 = vmul.f32 1.0, %v1484
    %1487 = vrot.lane.b32.xlu0 %v1475, 32
    %v1488 = vpop.permute.xlu0 %1487
    %v1490 = vmul.f32 %v1485, %v1488
    %1492 = vrot.lane.b32.xlu0 %v1490, 64
    %v1493 = vpop.permute.xlu0 %1492
    %v1495 = vadd.f32 %v1475, %v1493
    %v1496 = vtanh.pop %v1495
    %v1497 = vsub.f32 1.0, %v1485
    %1499 = vrot.lane.b32.xlu0 %v1496, 96
    %v1500 = vpop.permute.xlu0 %1499
    %v1502 = vmul.f32 %v1497, %v1500
    %v1503 = vmul.f32 %v1485, %v1351
    %v1504 = vadd.f32 %v1502, %v1503
    %1506 = vrot.lane.b32.xlu0 %v1504, 96
    %v1507 = vpop.permute.xlu0 %1506
    %s1509 = scalar_lea.vmem [#allocation3], 56
    %1510 = vst.msk [vmem:[%s1509] sm:$0xff] %vm239, %v1507
    %v1511 = vld [vmem:[#allocation3] sm:$0xff]
    %v1512 = vld [vmem:[#allocation3 + $0x8] sm:$0xff]
    %v1513 = vld [vmem:[#allocation3 + $0x10] sm:$0xff]
    %v1514 = vld [vmem:[#allocation3 + $0x18] sm:$0xff]
    %v1515 = vld [vmem:[#allocation3 + $0x20] sm:$0xff]
    %v1516 = vld [vmem:[#allocation3 + $0x28] sm:$0xff]
    %v1517 = vld [vmem:[#allocation3 + $0x30] sm:$0xff]
    %v1518 = vld [vmem:[#allocation3 + $0x38] sm:$0xff]
    %v1519 = vld [vmem:[%s1] sm:$0xff]
    %v1520 = vld [vmem:[%s1 + $0x8] sm:$0xff]
    %v1521 = vld [vmem:[%s1 + $0x10] sm:$0xff]
    %v1522 = vld [vmem:[%s1 + $0x18] sm:$0xff]
    %v1523 = vld [vmem:[%s1 + $0x20] sm:$0xff]
    %v1524 = vld [vmem:[%s1 + $0x28] sm:$0xff]
    %v1525 = vld [vmem:[%s1 + $0x30] sm:$0xff]
    %v1526 = vld [vmem:[%s1 + $0x38] sm:$0xff]
    %1528 = vset.pattern.permute.xlu0 0
    %1529 = vperm.xlu0 %1528, %v1519
    %v1530 = vpop.permute.xlu0 %1529
    %1533 = vset.pattern.permute.xlu0 0
    %1534 = vperm.xlu0 %1533, %v1520
    %v1535 = vpop.permute.xlu0 %1534
    %1538 = vset.pattern.permute.xlu0 0
    %1539 = vperm.xlu0 %1538, %v1521
    %v1540 = vpop.permute.xlu0 %1539
    %1543 = vset.pattern.permute.xlu0 0
    %1544 = vperm.xlu0 %1543, %v1522
    %v1545 = vpop.permute.xlu0 %1544
    %1548 = vset.pattern.permute.xlu0 0
    %1549 = vperm.xlu0 %1548, %v1523
    %v1550 = vpop.permute.xlu0 %1549
    %1553 = vset.pattern.permute.xlu0 0
    %1554 = vperm.xlu0 %1553, %v1524
    %v1555 = vpop.permute.xlu0 %1554
    %1558 = vset.pattern.permute.xlu0 0
    %1559 = vperm.xlu0 %1558, %v1525
    %v1560 = vpop.permute.xlu0 %1559
    %1563 = vset.pattern.permute.xlu0 0
    %1564 = vperm.xlu0 %1563, %v1526
    %v1565 = vpop.permute.xlu0 %1564
    %v1567 = vmul.f32 %v1511, %v1530
    %v1568 = vmul.f32 %v1512, %v1535
    %v1569 = vmul.f32 %v1513, %v1540
    %v1570 = vmul.f32 %v1514, %v1545
    %v1571 = vmul.f32 %v1515, %v1550
    %v1572 = vmul.f32 %v1516, %v1555
    %v1573 = vmul.f32 %v1517, %v1560
    %v1574 = vmul.f32 %v1518, %v1565
    %v1575 = vld [vmem:[#allocation9] sm:$0xff]
    %v1576 = vld [vmem:[#allocation9 + $0x8] sm:$0xff]
    %v1577 = vld [vmem:[#allocation9 + $0x10] sm:$0xff]
    %v1578 = vld [vmem:[#allocation9 + $0x18] sm:$0xff]
    %v1580 = vsel %vm239, %v1567, 0
    %v1583 = vsel %vm239, %v1568, 0
    %v1586 = vsel %vm239, %v1569, 0
    %v1589 = vsel %vm239, %v1570, 0
    %v1592 = vsel %vm239, %v1571, 0
    %v1595 = vsel %vm239, %v1572, 0
    %v1598 = vsel %vm239, %v1573, 0
    %v1601 = vsel %vm239, %v1574, 0
    %1603 = vmatprep.subr.mxu0 0.0
    %1604 = vmatpush1.msra.mxu0 %v1575
    %1605 = vmatprep.subr.mxu0 0.0
    %1606 = vmatpush1.msra.mxu0 %v1576
    %1607 = vmatprep.subr.mxu0 0.0
    %1608 = vmatpush1.msra.mxu0 %v1577
    %1609 = vmatprep.subr.mxu0 0.0
    %1610 = vmatpush1.msra.mxu0 %v1578
    %1611 = vmatprep.subr.mxu0 0.0
    %1612 = vmatpush1.msra.mxu0 0.0
    %1613 = vmatprep.subr.mxu0 0.0
    %1614 = vmatpush1.msra.mxu0 0.0
    %1615 = vmatprep.subr.mxu0 0.0
    %1616 = vmatpush1.msra.mxu0 0.0
    %1617 = vmatprep.subr.mxu0 0.0
    %1618 = vmatpush1.msra.mxu0 0.0
    %1619 = vmatprep.subr.mxu0 0.0
    %1620 = vmatpush1.msra.mxu0 0.0
    %1621 = vmatprep.subr.mxu0 0.0
    %1622 = vmatpush1.msra.mxu0 0.0
    %1623 = vmatprep.subr.mxu0 0.0
    %1624 = vmatpush1.msra.mxu0 0.0
    %1625 = vmatprep.subr.mxu0 0.0
    %1626 = vmatpush1.msra.mxu0 0.0
    %1627 = vmatprep.subr.mxu0 0.0
    %1628 = vmatpush1.msra.mxu0 0.0
    %1629 = vmatprep.subr.mxu0 0.0
    %1630 = vmatpush1.msra.mxu0 0.0
    %1631 = vmatprep.subr.mxu0 0.0
    %1632 = vmatpush1.msra.mxu0 0.0
    %1633 = vmatprep.subr.mxu0 0.0
    %1634 = vmatpush1.msra.mxu0 0.0
    %1635 = vmatprep.subr.mxu0 0.0
    %1636 = vmatpush1.msra.mxu0 0.0
    %1637 = vmatprep.subr.mxu0 0.0
    %1638 = vmatpush1.msra.mxu0 0.0
    %1639 = vmatprep.subr.mxu0 0.0
    %1640 = vmatpush1.msra.mxu0 0.0
    %1641 = vmatprep.subr.mxu0 0.0
    %1642 = vmatpush1.msra.mxu0 0.0
    %1643 = vmatprep.subr.mxu0 0.0
    %1644 = vmatpush1.msra.mxu0 0.0
    %1645 = vmatprep.subr.mxu0 0.0
    %1646 = vmatpush1.msra.mxu0 0.0
    %1647 = vmatprep.subr.mxu0 0.0
    %1648 = vmatpush1.msra.mxu0 0.0
    %1649 = vmatprep.subr.mxu0 0.0
    %1650 = vmatpush1.msra.mxu0 0.0
    %1651 = vmatprep.subr.mxu0 0.0
    %1652 = vmatpush1.msra.mxu0 0.0
    %1653 = vmatprep.subr.mxu0 0.0
    %1654 = vmatpush1.msra.mxu0 0.0
    %1655 = vmatprep.subr.mxu0 0.0
    %1656 = vmatpush1.msra.mxu0 0.0
    %1657 = vmatprep.subr.mxu0 0.0
    %1658 = vmatpush1.msra.mxu0 0.0
    %1659 = vmatprep.subr.mxu0 0.0
    %1660 = vmatpush1.msra.mxu0 0.0
    %1661 = vmatprep.subr.mxu0 0.0
    %1662 = vmatpush1.msra.mxu0 0.0
    %1663 = vmatprep.subr.mxu0 0.0
    %1664 = vmatpush1.msra.mxu0 0.0
    %1665 = vmatprep.subr.mxu0 0.0
    %1666 = vmatpush1.msra.mxu0 0.0
    %1667 = vmatprep.mubr.f32.mxu0 0.0
    %1668 = vmatmul.mubr.f32.gmra.mrb[0].mxu0 %v1580
    %v1669 = vpop.f32.mrb[0].mxu0
    %v1670 = vadd.f32 0.0, %v1669
    %v1671 = vpop.f32.mrb[0].mxu0
    %1672 = vmatprep.mubr.f32.mxu0 0.0
    %1673 = vmatmul.mubr.f32.gmra.mrb[0].mxu0 %v1583
    %v1674 = vpop.f32.mrb[0].mxu0
    %v1675 = vadd.f32 0.0, %v1674
    %v1676 = vpop.f32.mrb[0].mxu0
    %1677 = vmatprep.mubr.f32.mxu0 0.0
    %1678 = vmatmul.mubr.f32.gmra.mrb[0].mxu0 %v1586
    %v1679 = vpop.f32.mrb[0].mxu0
    %v1680 = vadd.f32 0.0, %v1679
    %v1681 = vpop.f32.mrb[0].mxu0
    %1682 = vmatprep.mubr.f32.mxu0 0.0
    %1683 = vmatmul.mubr.f32.gmra.mrb[0].mxu0 %v1589
    %v1684 = vpop.f32.mrb[0].mxu0
    %v1685 = vadd.f32 0.0, %v1684
    %v1686 = vpop.f32.mrb[0].mxu0
    %1687 = vmatprep.mubr.f32.mxu0 0.0
    %1688 = vmatmul.mubr.f32.gmra.mrb[0].mxu0 %v1592
    %v1689 = vpop.f32.mrb[0].mxu0
    %v1690 = vadd.f32 0.0, %v1689
    %v1691 = vpop.f32.mrb[0].mxu0
    %1692 = vmatprep.mubr.f32.mxu0 0.0
    %1693 = vmatmul.mubr.f32.gmra.mrb[0].mxu0 %v1595
    %v1694 = vpop.f32.mrb[0].mxu0
    %v1695 = vadd.f32 0.0, %v1694
    %v1696 = vpop.f32.mrb[0].mxu0
    %1697 = vmatprep.mubr.f32.mxu0 0.0
    %1698 = vmatmul.mubr.f32.gmra.mrb[0].mxu0 %v1598
    %v1699 = vpop.f32.mrb[0].mxu0
    %v1700 = vadd.f32 0.0, %v1699
    %v1701 = vpop.f32.mrb[0].mxu0
    %1702 = vmatprep.mubr.f32.mxu0 0.0
    %1703 = vmatmul.mubr.f32.gmra.mrb[0].mxu0 %v1601
    %v1704 = vpop.f32.mrb[0].mxu0
    %v1705 = vadd.f32 0.0, %v1704
    %v1706 = vpop.f32.mrb[0].mxu0
    %1707 = vdwg.mxu0
    %1708 = vst.msk [vmem:[#allocation10] sm:$0xff] %vm336, %v1670
    %1709 = vst.msk [vmem:[#allocation10 + $0x8] sm:$0xff] %vm336, %v1675
    %1710 = vst.msk [vmem:[#allocation10 + $0x10] sm:$0xff] %vm336, %v1680
    %1711 = vst.msk [vmem:[#allocation10 + $0x18] sm:$0xff] %vm336, %v1685
    %1712 = vst.msk [vmem:[#allocation10 + $0x20] sm:$0xff] %vm336, %v1690
    %1713 = vst.msk [vmem:[#allocation10 + $0x28] sm:$0xff] %vm336, %v1695
    %1714 = vst.msk [vmem:[#allocation10 + $0x30] sm:$0xff] %vm336, %v1700
    %1715 = vst.msk [vmem:[#allocation10 + $0x38] sm:$0xff] %vm336, %v1705
    // Predicated region
    $region38: #{tpu_custom_call.1} parent=1 // pred_check
      _
    $region39: #{tpu_custom_call.1} parent=1 // pred_check_branch
      %1717 = sbr.rel (0) target = $region41
    $region40: #{tpu_custom_call.1} parent=1 // pred_region
      %s1719 = ssub.s32 1024, 1024
      %1720 = vsyncadd [#allocation6], %s1719
      %s1721 = sshll.u32 [#allocation10], 4
      %s1722 = int_to_ptr.vmem [resolvable:$true] %s1721
      %1727 = dma.vmem_to_hbm [thread:$0]  %s1722, 1024, %s6, [#allocation6], 128, 128, 8
    $region41: #{tpu_custom_call.1} parent=1 // pred_fallthru
      _
    // Predicated region
    $region42: #{tpu_custom_call.1} parent=1 // pred_check
      _
    $region43: #{tpu_custom_call.1} parent=1 // pred_check_branch
      %1729 = sbr.rel (0) target = $region45
    $region44: #{tpu_custom_call.1} parent=1 // pred_region
      %1730 = dma.done [#allocation6], 1024
    $region45: #{tpu_custom_call.1} parent=1 // pred_fallthru
      _
    %1731 = vsyncpa [#allocation5], 1
    %1732 = vsyncpa [#allocation8], 1
    %1733 = vsyncpa [#allocation6], 1

</llo_original>
